<compile_context>
chip_gen: v6e
topology: v6e:2x2x1
jax: 0.10.0
libtpu: 0.0.40
codegen_flags: <defaults>
</compile_context>

<pallas_src>
import functools

import jax
import jax.numpy as jnp
from jax.experimental import pallas as pl
from jax.experimental.pallas import tpu as pltpu

NUM_BLOCKS = 2
TAU = 0.2
LN_EPS = 1e-5
_LOG_FLOOR = 1e-30


def _round_up(n, m):
    return ((n + m - 1) // m) * m


# ---------------------------------------------------------------------------
# Pallas kernel: transposed layout, batch on the lane axis.
#   x_t      : (F, Bt)            input tile, features x batch
#   w_tilde  : (D, F)             folded prototype+projection weight
#   rc       : (D, 2)             [r | c] folded vectors
#   blk_mats : (nb, 5, D, D)      [we_plus^T, we_minus^T, gate_w^T, prw1, prw2]
#   blk_vecs : (nb, D, 6)         [colmax, colmin, gate_b, proj_b, ln_g, ln_b]
#   w_out_t  : (O, D), b_out_t (O, 1)
#   out      : (O, Bt)            lane-dense writeback (batch on lanes)
# ---------------------------------------------------------------------------
def prototype_rune_kernel(x_ref, wt_ref, rc_ref, mats_ref, vecs_ref,
                          wout_ref, bout_ref, out_ref, *, num_blocks, tau):
    inv_tau = 1.0 / tau
    x_t = x_ref[...]                                      # (F, Bt)

    # --- folded PrototypeLayer + input projection ---
    r = rc_ref[:, 0:1]                                    # (D, 1)
    c = rc_ref[:, 1:2]                                    # (D, 1)
    x2 = jnp.sum(x_t * x_t, axis=0, keepdims=True)        # (1, Bt)
    h = (jnp.dot(wt_ref[...], x_t, preferred_element_type=jnp.float32)
         + r * x2 + c)                                    # (D, Bt)

    # --- stacked RUNEBlocks (statically unrolled) ---
    for i in range(num_blocks):
        mats = mats_ref[i]                                # (5, D, D)
        vecs = vecs_ref[i]                                # (D, 6)
        we_p, we_m, gw = mats[0], mats[1], mats[2]
        prw1, prw2 = mats[3], mats[4]
        mwp, mnm = vecs[:, 0:1], vecs[:, 1:2]
        gb, prb = vecs[:, 2:3], vecs[:, 3:4]
        lng, lnb = vecs[:, 4:5], vecs[:, 5:6]

        # soft tropical max-plus (weight exponentials precomputed outside)
        mx = jnp.max(h, axis=0, keepdims=True)            # (1, Bt)
        a_p = jnp.exp((h - mx) * inv_tau)                 # (D, Bt), full lanes
        s_p = jnp.dot(we_p, a_p, preferred_element_type=jnp.float32)
        plus = mx + mwp + tau * jnp.log(jnp.maximum(s_p, _LOG_FLOOR))

        # soft tropical min-plus
        mn = jnp.min(h, axis=0, keepdims=True)
        a_m = jnp.exp((mn - h) * inv_tau)
        s_m = jnp.dot(we_m, a_m, preferred_element_type=jnp.float32)
        minus = mn + mnm - tau * jnp.log(jnp.maximum(s_m, _LOG_FLOOR))

        # sigmoid(z) == 0.5*tanh(0.5*z) + 0.5 : a single EUP pass
        z = jnp.dot(gw, h, preferred_element_type=jnp.float32) + gb
        gate = 0.5 * jnp.tanh(0.5 * z) + 0.5

        # projection of concat([gate*diff, (1-gate)*h]) WITHOUT materializing
        # the concatenation: two K=D matmuls into the same accumulator
        proj = (jnp.dot(prw1, gate * (plus - minus),
                        preferred_element_type=jnp.float32)
                + jnp.dot(prw2, (1.0 - gate) * h,
                          preferred_element_type=jnp.float32)
                + prb)

        # residual (dropout = identity in eval) + LayerNorm over features
        y = h + proj
        mu = jnp.mean(y, axis=0, keepdims=True)
        yc = y - mu
        var = jnp.mean(yc * yc, axis=0, keepdims=True)
        h = yc * jax.lax.rsqrt(var + LN_EPS) * lng + lnb

    # --- output head: (O, Bt) lane-dense store ---
    out_ref[...] = (jnp.dot(wout_ref[...], h, preferred_element_type=jnp.float32)
                    + bout_ref[...])


# ---------------------------------------------------------------------------
# weight-only precompute; depends only on the parameters, never on x.
# Call ONCE per parameter set (do not re-run per forward).
# ---------------------------------------------------------------------------
def prepare_params(params, tau=TAU):
    hi = jax.lax.Precision.HIGHEST

    # fold PrototypeLayer + input projection
    protos = params["protos"]                                    # (P, F)
    protos_sq = jnp.sum(protos * protos, axis=1, keepdims=True)  # (P, 1)
    w_in_t = params["w_in"].T                                    # (D, P)
    w_tilde = -2.0 * jnp.dot(w_in_t, protos, precision=hi)       # (D, F)
    r = jnp.sum(w_in_t, axis=1, keepdims=True)                   # (D, 1)
    c = jnp.dot(w_in_t, protos_sq, precision=hi) + params["b_in"].T
    rc = jnp.concatenate([r, c], axis=1)                         # (D, 2)

    # per-block tropical exponentials + transposes
    pw = params["plus_w"]                                        # (nb, D, D)
    d = pw.shape[1]
    mwp = jnp.max(pw, axis=1, keepdims=True)                     # (nb, 1, D)
    we_plus_t = jnp.exp((pw - mwp) / tau).transpose(0, 2, 1)     # (nb, D, D)
    mw = params["minus_w"]
    mnm = jnp.min(mw, axis=1, keepdims=True)
    we_minus_t = jnp.exp(-(mw - mnm) / tau).transpose(0, 2, 1)
    gate_w_t = params["gate_w"].transpose(0, 2, 1)
    proj_w_t = params["proj_w"].transpose(0, 2, 1)               # (nb, D, 2D)
    prw1, prw2 = proj_w_t[:, :, :d], proj_w_t[:, :, d:]

    # pack the many tiny refs: 5 DxD matrices + 6 length-D vectors per block
    blk_mats = jnp.stack([we_plus_t, we_minus_t, gate_w_t, prw1, prw2], axis=1)
    blk_vecs = jnp.concatenate(
        [mwp.transpose(0, 2, 1), mnm.transpose(0, 2, 1),
         params["gate_b"].transpose(0, 2, 1), params["proj_b"].transpose(0, 2, 1),
         params["ln_g"].transpose(0, 2, 1), params["ln_b"].transpose(0, 2, 1)],
        axis=2)                                                  # (nb, D, 6)

    return dict(w_tilde=w_tilde, rc=rc, blk_mats=blk_mats, blk_vecs=blk_vecs,
                w_out_t=params["w_out"].T, b_out_t=params["b_out"].T)


def _choose_tiling(b, batch_tile):
    """Tile multiple of 128, minimal last-tile padding, >=2 grid steps when
    the batch allows it (so v7x megacore can split the batch)."""
    n_tiles = max(1, pl.cdiv(b, batch_tile))
    if n_tiles == 1 and b > 128:
        n_tiles = 2
    bt = _round_up(pl.cdiv(b, n_tiles), 128)
    return bt, n_tiles * bt


@functools.partial(jax.jit, static_argnames=("batch_tile",))
def prototype_rune_net(x, kparams, batch_tile=4096):
    b, f = x.shape
    nb, _, d, _ = kparams["blk_mats"].shape
    o = kparams["w_out_t"].shape[0]

    bt, b_pad = _choose_tiling(b, batch_tile)
    grid = b_pad // bt

    # jit fuses the pad + transpose into a single tiny op ahead of the kernel
    x_t = jnp.pad(x, ((0, b_pad - b), (0, 0))).T                 # (F, B_pad)

    const_args = (kparams["w_tilde"], kparams["rc"], kparams["blk_mats"],
                  kparams["blk_vecs"], kparams["w_out_t"], kparams["b_out_t"])

    def _const_spec(a):
        # full-array block, constant index map -> DMA'd once, resident in VMEM
        nd = a.ndim
        return pl.BlockSpec(a.shape, lambda i, _nd=nd: (0,) * _nd)

    in_specs = ([pl.BlockSpec((f, bt), lambda i: (0, i))]
                + [_const_spec(a) for a in const_args])
    out_specs = pl.BlockSpec((o, bt), lambda i: (0, i))

    const_bytes = 4 * sum(int(a.size) for a in const_args)
    cost = pl.CostEstimate(
        flops=2 * b_pad * (d * f + nb * 5 * d * d + o * d) + 25 * b_pad * d * nb,
        transcendentals=5 * b_pad * d * nb,                      # 2 exp+2 log+tanh
        bytes_accessed=4 * (b_pad * f + b_pad * o) + const_bytes)

    kernel = functools.partial(prototype_rune_kernel, num_blocks=nb, tau=TAU)

    out_t = pl.pallas_call(
        kernel,
        out_shape=jax.ShapeDtypeStruct((o, b_pad), jnp.float32),
        grid=(grid,),
        in_specs=in_specs,
        out_specs=out_specs,
        compiler_params=pltpu.CompilerParams(
            dimension_semantics=("parallel",),          # batch split on v7x
            vmem_limit_bytes=32 * 1024 * 1024),
        cost_estimate=cost,
    )(x_t, *const_args)

    return out_t[:, :b].T                                         # (B, O)


# ---------------------------------------------------------------------------
# pure-JAX reference (module semantics, standard [batch, features] layout)
# ---------------------------------------------------------------------------
def reference_forward(x, params):
    hi = jax.lax.Precision.HIGHEST
    protos = params["protos"]
    x2 = jnp.sum(x * x, axis=-1, keepdims=True)
    p2 = jnp.sum(protos * protos, axis=-1)[None, :]
    dist = x2 + p2 - 2.0 * jnp.dot(x, protos.T, precision=hi)
    h = jnp.dot(dist, params["w_in"], precision=hi) + params["b_in"]
    for i in range(NUM_BLOCKS):
        pw, mw_ = params["plus_w"][i], params["minus_w"][i]
        mx = jnp.max(h, axis=-1, keepdims=True)
        mwp = jnp.max(pw, axis=0, keepdims=True)
        plus = mx + mwp + TAU * jnp.log(jnp.maximum(
            jnp.dot(jnp.exp((h - mx) / TAU), jnp.exp((pw - mwp) / TAU),
                    precision=hi), _LOG_FLOOR))
        mn = jnp.min(h, axis=-1, keepdims=True)
        mnm = jnp.min(mw_, axis=0, keepdims=True)
        minus = mn + mnm - TAU * jnp.log(jnp.maximum(
            jnp.dot(jnp.exp(-(h - mn) / TAU), jnp.exp(-(mw_ - mnm) / TAU),
                    precision=hi), _LOG_FLOOR))
        gate = jax.nn.sigmoid(
            jnp.dot(h, params["gate_w"][i], precision=hi) + params["gate_b"][i])
        agg = jnp.concatenate([gate * (plus - minus), (1.0 - gate) * h], axis=-1)
        y = h + jnp.dot(agg, params["proj_w"][i], precision=hi) + params["proj_b"][i]
        mu = jnp.mean(y, axis=-1, keepdims=True)
        var = jnp.mean((y - mu) ** 2, axis=-1, keepdims=True)
        h = (y - mu) * jax.lax.rsqrt(var + LN_EPS) * params["ln_g"][i] + params["ln_b"][i]
    return jnp.dot(h, params["w_out"], precision=hi) + params["b_out"]


# ---------------------------------------------------------------------------
# deterministic parameter init (shapes follow the PyTorch module constructors)
# ---------------------------------------------------------------------------
def init_params(key, input_dim, num_prototypes, output_dim, block_dim, num_blocks):
    keys = iter(jax.random.split(key, 32))
    d = block_dim

    def nrm(shape, scale):
        return scale * jax.random.normal(next(keys), shape, dtype=jnp.float32)

    return dict(
        protos=nrm((num_prototypes, input_dim), 1.0),
        w_in=nrm((num_prototypes, d), 1.0 / float(num_prototypes) ** 0.5),
        b_in=nrm((1, d), 0.01),
        plus_w=nrm((num_blocks, d, d), 0.1),
        minus_w=nrm((num_blocks, d, d), 0.1),
        gate_w=nrm((num_blocks, d, d), 1.0 / float(d) ** 0.5),
        gate_b=nrm((num_blocks, 1, d), 0.01),
        proj_w=nrm((num_blocks, 2 * d, d), 1.0 / float(2 * d) ** 0.5),
        proj_b=nrm((num_blocks, 1, d), 0.01),
        ln_g=jnp.ones((num_blocks, 1, d), jnp.float32),
        ln_b=jnp.zeros((num_blocks, 1, d), jnp.float32),
        w_out=nrm((d, output_dim), 1.0 / float(d) ** 0.5),
        b_out=nrm((1, output_dim), 0.01),
    )


if __name__ == "__main__":
    B, INPUT_DIM, NUM_PROTOTYPES, BLOCK_DIM, OUTPUT_DIM = 8, 16, 16, 32, 4

    key = jax.random.PRNGKey(0)
    kx, kp = jax.random.split(key)
    x = jax.random.normal(kx, (B, INPUT_DIM), dtype=jnp.float32)
    params = init_params(kp, INPUT_DIM, NUM_PROTOTYPES, OUTPUT_DIM,
                         BLOCK_DIM, NUM_BLOCKS)

    kparams = prepare_params(params)          # weight-only precompute, runs once
    out = prototype_rune_net(x, kparams)
    out = jax.block_until_ready(out)

    ref = reference_forward(x, params)
    assert out.shape == (B, OUTPUT_DIM)
    assert bool(jnp.all(jnp.isfinite(out))), "kernel produced non-finite values"
    assert bool(jnp.allclose(out, ref, rtol=1e-3, atol=1e-3)), "kernel != reference"

    print("KERNEL_OK")
</pallas_src>

<mosaic_0001>
module attributes {stable_mosaic.version = 11 : i64} {
  func.func @prototype_rune_kernel(%arg0: i32, %arg1: memref<16x128xf32, #tpu.memory_space<vmem>>, %arg2: memref<32x16xf32, #tpu.memory_space<vmem>>, %arg3: memref<32x2xf32, #tpu.memory_space<vmem>>, %arg4: memref<2x5x32x32xf32, #tpu.memory_space<vmem>>, %arg5: memref<2x32x6xf32, #tpu.memory_space<vmem>>, %arg6: memref<4x32xf32, #tpu.memory_space<vmem>>, %arg7: memref<4x1xf32, #tpu.memory_space<vmem>>, %arg8: memref<4x128xf32, #tpu.memory_space<vmem>>) attributes {dimension_semantics = [#tpu.dimension_semantics<parallel>], iteration_bounds = array<i64: 1>, scalar_prefetch = 0 : i64, scratch_operands = 0 : i64, tpu.core_type = #tpu.core_type<tc>, window_params = [{transform_indices = @transform_0, window_bounds = array<i64: 16, 128>}, {pipeline_mode = #tpu.pipeline_mode<synchronous>, transform_indices = @transform_1, window_bounds = array<i64: 32, 16>}, {pipeline_mode = #tpu.pipeline_mode<synchronous>, transform_indices = @transform_2, window_bounds = array<i64: 32, 2>}, {pipeline_mode = #tpu.pipeline_mode<synchronous>, transform_indices = @transform_3, window_bounds = array<i64: 2, 5, 32, 32>}, {pipeline_mode = #tpu.pipeline_mode<synchronous>, transform_indices = @transform_4, window_bounds = array<i64: 2, 32, 6>}, {pipeline_mode = #tpu.pipeline_mode<synchronous>, transform_indices = @transform_5, window_bounds = array<i64: 4, 32>}, {pipeline_mode = #tpu.pipeline_mode<synchronous>, transform_indices = @transform_6, window_bounds = array<i64: 4, 1>}, {transform_indices = @transform_7, window_bounds = array<i64: 4, 128>}]} {
    %c0 = arith.constant 0 : index
    %c0_0 = arith.constant 0 : index
    %0 = vector.load %arg1[%c0, %c0_0] : memref<16x128xf32, #tpu.memory_space<vmem>>, vector<16x128xf32>
    %c0_1 = arith.constant 0 : index
    %c0_2 = arith.constant 0 : index
    %1 = vector.load %arg3[%c0_1, %c0_2] : memref<32x2xf32, #tpu.memory_space<vmem>>, vector<32x1xf32>
    %c0_3 = arith.constant 0 : index
    %c1 = arith.constant 1 : index
    %2 = vector.load %arg3[%c0_3, %c1] : memref<32x2xf32, #tpu.memory_space<vmem>>, vector<32x1xf32>
    %3 = arith.mulf %0, %0 : vector<16x128xf32>
    %cst = arith.constant dense<0.000000e+00> : vector<128xf32>
    %4 = vector.multi_reduction <add>, %3, %cst [0] : vector<16x128xf32> to vector<128xf32>
    %5 = vector.shape_cast %4 : vector<128xf32> to vector<1x128xf32>
    %c0_4 = arith.constant 0 : index
    %c0_5 = arith.constant 0 : index
    %6 = vector.load %arg2[%c0_4, %c0_5] : memref<32x16xf32, #tpu.memory_space<vmem>>, vector<32x16xf32>
    %cst_6 = arith.constant dense<0.000000e+00> : vector<32x128xf32>
    %7 = tpu.matmul %6, %0, %cst_6 {dimension_numbers = #tpu.dot_dimension_numbers<[1], [0], [0], [1], [0, 0, 1, 1], [], []>} : vector<32x16xf32>, vector<16x128xf32>, vector<32x128xf32> -> vector<32x128xf32>
    %8 = vector.broadcast %1 : vector<32x1xf32> to vector<32x128xf32>
    %9 = vector.broadcast %5 : vector<1x128xf32> to vector<32x128xf32>
    %10 = arith.mulf %8, %9 : vector<32x128xf32>
    %11 = arith.addf %7, %10 : vector<32x128xf32>
    %12 = vector.broadcast %2 : vector<32x1xf32> to vector<32x128xf32>
    %13 = arith.addf %11, %12 : vector<32x128xf32>
    %c0_7 = arith.constant 0 : index
    %c0_8 = arith.constant 0 : index
    %c0_9 = arith.constant 0 : index
    %c0_10 = arith.constant 0 : index
    %14 = vector.load %arg4[%c0_7, %c0_8, %c0_9, %c0_10] : memref<2x5x32x32xf32, #tpu.memory_space<vmem>>, vector<1x5x32x32xf32>
    %15 = vector.shape_cast %14 : vector<1x5x32x32xf32> to vector<5x32x32xf32>
    %c0_11 = arith.constant 0 : index
    %c0_12 = arith.constant 0 : index
    %c0_13 = arith.constant 0 : index
    %16 = vector.load %arg5[%c0_11, %c0_12, %c0_13] : memref<2x32x6xf32, #tpu.memory_space<vmem>>, vector<1x32x6xf32>
    %17 = vector.shape_cast %16 : vector<1x32x6xf32> to vector<32x6xf32>
    %18 = vector.extract_strided_slice %15 {offsets = [0, 0, 0], sizes = [1, 32, 32], strides = [1, 1, 1]} : vector<5x32x32xf32> to vector<1x32x32xf32>
    %19 = vector.shape_cast %18 : vector<1x32x32xf32> to vector<32x32xf32>
    %20 = vector.extract_strided_slice %15 {offsets = [1, 0, 0], sizes = [1, 32, 32], strides = [1, 1, 1]} : vector<5x32x32xf32> to vector<1x32x32xf32>
    %21 = vector.shape_cast %20 : vector<1x32x32xf32> to vector<32x32xf32>
    %22 = vector.extract_strided_slice %15 {offsets = [2, 0, 0], sizes = [1, 32, 32], strides = [1, 1, 1]} : vector<5x32x32xf32> to vector<1x32x32xf32>
    %23 = vector.shape_cast %22 : vector<1x32x32xf32> to vector<32x32xf32>
    %24 = vector.extract_strided_slice %15 {offsets = [3, 0, 0], sizes = [1, 32, 32], strides = [1, 1, 1]} : vector<5x32x32xf32> to vector<1x32x32xf32>
    %25 = vector.shape_cast %24 : vector<1x32x32xf32> to vector<32x32xf32>
    %26 = vector.extract_strided_slice %15 {offsets = [4, 0, 0], sizes = [1, 32, 32], strides = [1, 1, 1]} : vector<5x32x32xf32> to vector<1x32x32xf32>
    %27 = vector.shape_cast %26 : vector<1x32x32xf32> to vector<32x32xf32>
    %28 = vector.extract_strided_slice %17 {offsets = [0, 0], sizes = [32, 1], strides = [1, 1]} : vector<32x6xf32> to vector<32x1xf32>
    %29 = vector.extract_strided_slice %17 {offsets = [0, 1], sizes = [32, 1], strides = [1, 1]} : vector<32x6xf32> to vector<32x1xf32>
    %30 = vector.extract_strided_slice %17 {offsets = [0, 2], sizes = [32, 1], strides = [1, 1]} : vector<32x6xf32> to vector<32x1xf32>
    %31 = vector.extract_strided_slice %17 {offsets = [0, 3], sizes = [32, 1], strides = [1, 1]} : vector<32x6xf32> to vector<32x1xf32>
    %32 = vector.extract_strided_slice %17 {offsets = [0, 4], sizes = [32, 1], strides = [1, 1]} : vector<32x6xf32> to vector<32x1xf32>
    %33 = vector.extract_strided_slice %17 {offsets = [0, 5], sizes = [32, 1], strides = [1, 1]} : vector<32x6xf32> to vector<32x1xf32>
    %cst_14 = arith.constant dense<0xFF800000> : vector<128xf32>
    %34 = vector.multi_reduction <maximumf>, %13, %cst_14 [0] : vector<32x128xf32> to vector<128xf32>
    %35 = vector.shape_cast %34 : vector<128xf32> to vector<1x128xf32>
    %36 = vector.broadcast %35 : vector<1x128xf32> to vector<32x128xf32>
    %37 = arith.subf %13, %36 : vector<32x128xf32>
    %cst_15 = arith.constant 5.000000e+00 : f32
    %38 = vector.broadcast %cst_15 : f32 to vector<32x128xf32>
    %39 = arith.mulf %37, %38 : vector<32x128xf32>
    %40 = math.exp %39 : vector<32x128xf32>
    %cst_16 = arith.constant dense<0.000000e+00> : vector<32x128xf32>
    %41 = tpu.matmul %19, %40, %cst_16 {dimension_numbers = #tpu.dot_dimension_numbers<[1], [0], [0], [1], [0, 0, 1, 1], [], []>} : vector<32x32xf32>, vector<32x128xf32>, vector<32x128xf32> -> vector<32x128xf32>
    %42 = vector.broadcast %35 : vector<1x128xf32> to vector<32x128xf32>
    %43 = vector.broadcast %28 : vector<32x1xf32> to vector<32x128xf32>
    %44 = arith.addf %42, %43 : vector<32x128xf32>
    %cst_17 = arith.constant 1.000000e-30 : f32
    %45 = vector.broadcast %cst_17 : f32 to vector<32x128xf32>
    %46 = arith.maximumf %41, %45 : vector<32x128xf32>
    %47 = math.log %46 : vector<32x128xf32>
    %cst_18 = arith.constant 2.000000e-01 : f32
    %48 = vector.broadcast %cst_18 : f32 to vector<32x128xf32>
    %49 = arith.mulf %48, %47 : vector<32x128xf32>
    %50 = arith.addf %44, %49 : vector<32x128xf32>
    %cst_19 = arith.constant dense<0x7F800000> : vector<128xf32>
    %51 = vector.multi_reduction <minimumf>, %13, %cst_19 [0] : vector<32x128xf32> to vector<128xf32>
    %52 = vector.shape_cast %51 : vector<128xf32> to vector<1x128xf32>
    %53 = vector.broadcast %52 : vector<1x128xf32> to vector<32x128xf32>
    %54 = arith.subf %53, %13 : vector<32x128xf32>
    %cst_20 = arith.constant 5.000000e+00 : f32
    %55 = vector.broadcast %cst_20 : f32 to vector<32x128xf32>
    %56 = arith.mulf %54, %55 : vector<32x128xf32>
    %57 = math.exp %56 : vector<32x128xf32>
    %cst_21 = arith.constant dense<0.000000e+00> : vector<32x128xf32>
    %58 = tpu.matmul %21, %57, %cst_21 {dimension_numbers = #tpu.dot_dimension_numbers<[1], [0], [0], [1], [0, 0, 1, 1], [], []>} : vector<32x32xf32>, vector<32x128xf32>, vector<32x128xf32> -> vector<32x128xf32>
    %59 = vector.broadcast %52 : vector<1x128xf32> to vector<32x128xf32>
    %60 = vector.broadcast %29 : vector<32x1xf32> to vector<32x128xf32>
    %61 = arith.addf %59, %60 : vector<32x128xf32>
    %cst_22 = arith.constant 1.000000e-30 : f32
    %62 = vector.broadcast %cst_22 : f32 to vector<32x128xf32>
    %63 = arith.maximumf %58, %62 : vector<32x128xf32>
    %64 = math.log %63 : vector<32x128xf32>
    %cst_23 = arith.constant 2.000000e-01 : f32
    %65 = vector.broadcast %cst_23 : f32 to vector<32x128xf32>
    %66 = arith.mulf %65, %64 : vector<32x128xf32>
    %67 = arith.subf %61, %66 : vector<32x128xf32>
    %cst_24 = arith.constant dense<0.000000e+00> : vector<32x128xf32>
    %68 = tpu.matmul %23, %13, %cst_24 {dimension_numbers = #tpu.dot_dimension_numbers<[1], [0], [0], [1], [0, 0, 1, 1], [], []>} : vector<32x32xf32>, vector<32x128xf32>, vector<32x128xf32> -> vector<32x128xf32>
    %69 = vector.broadcast %30 : vector<32x1xf32> to vector<32x128xf32>
    %70 = arith.addf %68, %69 : vector<32x128xf32>
    %cst_25 = arith.constant 5.000000e-01 : f32
    %71 = vector.broadcast %cst_25 : f32 to vector<32x128xf32>
    %72 = arith.mulf %71, %70 : vector<32x128xf32>
    %73 = math.tanh %72 : vector<32x128xf32>
    %cst_26 = arith.constant 5.000000e-01 : f32
    %74 = vector.broadcast %cst_26 : f32 to vector<32x128xf32>
    %75 = arith.mulf %74, %73 : vector<32x128xf32>
    %cst_27 = arith.constant 5.000000e-01 : f32
    %76 = vector.broadcast %cst_27 : f32 to vector<32x128xf32>
    %77 = arith.addf %75, %76 : vector<32x128xf32>
    %78 = arith.subf %50, %67 : vector<32x128xf32>
    %79 = arith.mulf %77, %78 : vector<32x128xf32>
    %cst_28 = arith.constant dense<0.000000e+00> : vector<32x128xf32>
    %80 = tpu.matmul %25, %79, %cst_28 {dimension_numbers = #tpu.dot_dimension_numbers<[1], [0], [0], [1], [0, 0, 1, 1], [], []>} : vector<32x32xf32>, vector<32x128xf32>, vector<32x128xf32> -> vector<32x128xf32>
    %cst_29 = arith.constant 1.000000e+00 : f32
    %81 = vector.broadcast %cst_29 : f32 to vector<32x128xf32>
    %82 = arith.subf %81, %77 : vector<32x128xf32>
    %83 = arith.mulf %82, %13 : vector<32x128xf32>
    %cst_30 = arith.constant dense<0.000000e+00> : vector<32x128xf32>
    %84 = tpu.matmul %27, %83, %cst_30 {dimension_numbers = #tpu.dot_dimension_numbers<[1], [0], [0], [1], [0, 0, 1, 1], [], []>} : vector<32x32xf32>, vector<32x128xf32>, vector<32x128xf32> -> vector<32x128xf32>
    %85 = arith.addf %80, %84 : vector<32x128xf32>
    %86 = vector.broadcast %31 : vector<32x1xf32> to vector<32x128xf32>
    %87 = arith.addf %85, %86 : vector<32x128xf32>
    %88 = arith.addf %13, %87 : vector<32x128xf32>
    %cst_31 = arith.constant dense<0.000000e+00> : vector<128xf32>
    %89 = vector.multi_reduction <add>, %88, %cst_31 [0] : vector<32x128xf32> to vector<128xf32>
    %90 = vector.shape_cast %89 : vector<128xf32> to vector<1x128xf32>
    %cst_32 = arith.constant 3.200000e+01 : f32
    %91 = vector.broadcast %cst_32 : f32 to vector<1x128xf32>
    %92 = arith.divf %90, %91 : vector<1x128xf32>
    %93 = vector.broadcast %92 : vector<1x128xf32> to vector<32x128xf32>
    %94 = arith.subf %88, %93 : vector<32x128xf32>
    %95 = arith.mulf %94, %94 : vector<32x128xf32>
    %cst_33 = arith.constant dense<0.000000e+00> : vector<128xf32>
    %96 = vector.multi_reduction <add>, %95, %cst_33 [0] : vector<32x128xf32> to vector<128xf32>
    %97 = vector.shape_cast %96 : vector<128xf32> to vector<1x128xf32>
    %cst_34 = arith.constant 3.200000e+01 : f32
    %98 = vector.broadcast %cst_34 : f32 to vector<1x128xf32>
    %99 = arith.divf %97, %98 : vector<1x128xf32>
    %cst_35 = arith.constant 9.99999974E-6 : f32
    %100 = vector.broadcast %cst_35 : f32 to vector<1x128xf32>
    %101 = arith.addf %99, %100 : vector<1x128xf32>
    %102 = math.rsqrt %101 : vector<1x128xf32>
    %103 = vector.broadcast %102 : vector<1x128xf32> to vector<32x128xf32>
    %104 = arith.mulf %94, %103 : vector<32x128xf32>
    %105 = vector.broadcast %32 : vector<32x1xf32> to vector<32x128xf32>
    %106 = arith.mulf %104, %105 : vector<32x128xf32>
    %107 = vector.broadcast %33 : vector<32x1xf32> to vector<32x128xf32>
    %108 = arith.addf %106, %107 : vector<32x128xf32>
    %c1_36 = arith.constant 1 : index
    %c0_37 = arith.constant 0 : index
    %c0_38 = arith.constant 0 : index
    %c0_39 = arith.constant 0 : index
    %109 = vector.load %arg4[%c1_36, %c0_37, %c0_38, %c0_39] : memref<2x5x32x32xf32, #tpu.memory_space<vmem>>, vector<1x5x32x32xf32>
    %110 = vector.shape_cast %109 : vector<1x5x32x32xf32> to vector<5x32x32xf32>
    %c1_40 = arith.constant 1 : index
    %c0_41 = arith.constant 0 : index
    %c0_42 = arith.constant 0 : index
    %111 = vector.load %arg5[%c1_40, %c0_41, %c0_42] : memref<2x32x6xf32, #tpu.memory_space<vmem>>, vector<1x32x6xf32>
    %112 = vector.shape_cast %111 : vector<1x32x6xf32> to vector<32x6xf32>
    %113 = vector.extract_strided_slice %110 {offsets = [0, 0, 0], sizes = [1, 32, 32], strides = [1, 1, 1]} : vector<5x32x32xf32> to vector<1x32x32xf32>
    %114 = vector.shape_cast %113 : vector<1x32x32xf32> to vector<32x32xf32>
    %115 = vector.extract_strided_slice %110 {offsets = [1, 0, 0], sizes = [1, 32, 32], strides = [1, 1, 1]} : vector<5x32x32xf32> to vector<1x32x32xf32>
    %116 = vector.shape_cast %115 : vector<1x32x32xf32> to vector<32x32xf32>
    %117 = vector.extract_strided_slice %110 {offsets = [2, 0, 0], sizes = [1, 32, 32], strides = [1, 1, 1]} : vector<5x32x32xf32> to vector<1x32x32xf32>
    %118 = vector.shape_cast %117 : vector<1x32x32xf32> to vector<32x32xf32>
    %119 = vector.extract_strided_slice %110 {offsets = [3, 0, 0], sizes = [1, 32, 32], strides = [1, 1, 1]} : vector<5x32x32xf32> to vector<1x32x32xf32>
    %120 = vector.shape_cast %119 : vector<1x32x32xf32> to vector<32x32xf32>
    %121 = vector.extract_strided_slice %110 {offsets = [4, 0, 0], sizes = [1, 32, 32], strides = [1, 1, 1]} : vector<5x32x32xf32> to vector<1x32x32xf32>
    %122 = vector.shape_cast %121 : vector<1x32x32xf32> to vector<32x32xf32>
    %123 = vector.extract_strided_slice %112 {offsets = [0, 0], sizes = [32, 1], strides = [1, 1]} : vector<32x6xf32> to vector<32x1xf32>
    %124 = vector.extract_strided_slice %112 {offsets = [0, 1], sizes = [32, 1], strides = [1, 1]} : vector<32x6xf32> to vector<32x1xf32>
    %125 = vector.extract_strided_slice %112 {offsets = [0, 2], sizes = [32, 1], strides = [1, 1]} : vector<32x6xf32> to vector<32x1xf32>
    %126 = vector.extract_strided_slice %112 {offsets = [0, 3], sizes = [32, 1], strides = [1, 1]} : vector<32x6xf32> to vector<32x1xf32>
    %127 = vector.extract_strided_slice %112 {offsets = [0, 4], sizes = [32, 1], strides = [1, 1]} : vector<32x6xf32> to vector<32x1xf32>
    %128 = vector.extract_strided_slice %112 {offsets = [0, 5], sizes = [32, 1], strides = [1, 1]} : vector<32x6xf32> to vector<32x1xf32>
    %cst_43 = arith.constant dense<0xFF800000> : vector<128xf32>
    %129 = vector.multi_reduction <maximumf>, %108, %cst_43 [0] : vector<32x128xf32> to vector<128xf32>
    %130 = vector.shape_cast %129 : vector<128xf32> to vector<1x128xf32>
    %131 = vector.broadcast %130 : vector<1x128xf32> to vector<32x128xf32>
    %132 = arith.subf %108, %131 : vector<32x128xf32>
    %cst_44 = arith.constant 5.000000e+00 : f32
    %133 = vector.broadcast %cst_44 : f32 to vector<32x128xf32>
    %134 = arith.mulf %132, %133 : vector<32x128xf32>
    %135 = math.exp %134 : vector<32x128xf32>
    %cst_45 = arith.constant dense<0.000000e+00> : vector<32x128xf32>
    %136 = tpu.matmul %114, %135, %cst_45 {dimension_numbers = #tpu.dot_dimension_numbers<[1], [0], [0], [1], [0, 0, 1, 1], [], []>} : vector<32x32xf32>, vector<32x128xf32>, vector<32x128xf32> -> vector<32x128xf32>
    %137 = vector.broadcast %130 : vector<1x128xf32> to vector<32x128xf32>
    %138 = vector.broadcast %123 : vector<32x1xf32> to vector<32x128xf32>
    %139 = arith.addf %137, %138 : vector<32x128xf32>
    %cst_46 = arith.constant 1.000000e-30 : f32
    %140 = vector.broadcast %cst_46 : f32 to vector<32x128xf32>
    %141 = arith.maximumf %136, %140 : vector<32x128xf32>
    %142 = math.log %141 : vector<32x128xf32>
    %cst_47 = arith.constant 2.000000e-01 : f32
    %143 = vector.broadcast %cst_47 : f32 to vector<32x128xf32>
    %144 = arith.mulf %143, %142 : vector<32x128xf32>
    %145 = arith.addf %139, %144 : vector<32x128xf32>
    %cst_48 = arith.constant dense<0x7F800000> : vector<128xf32>
    %146 = vector.multi_reduction <minimumf>, %108, %cst_48 [0] : vector<32x128xf32> to vector<128xf32>
    %147 = vector.shape_cast %146 : vector<128xf32> to vector<1x128xf32>
    %148 = vector.broadcast %147 : vector<1x128xf32> to vector<32x128xf32>
    %149 = arith.subf %148, %108 : vector<32x128xf32>
    %cst_49 = arith.constant 5.000000e+00 : f32
    %150 = vector.broadcast %cst_49 : f32 to vector<32x128xf32>
    %151 = arith.mulf %149, %150 : vector<32x128xf32>
    %152 = math.exp %151 : vector<32x128xf32>
    %cst_50 = arith.constant dense<0.000000e+00> : vector<32x128xf32>
    %153 = tpu.matmul %116, %152, %cst_50 {dimension_numbers = #tpu.dot_dimension_numbers<[1], [0], [0], [1], [0, 0, 1, 1], [], []>} : vector<32x32xf32>, vector<32x128xf32>, vector<32x128xf32> -> vector<32x128xf32>
    %154 = vector.broadcast %147 : vector<1x128xf32> to vector<32x128xf32>
    %155 = vector.broadcast %124 : vector<32x1xf32> to vector<32x128xf32>
    %156 = arith.addf %154, %155 : vector<32x128xf32>
    %cst_51 = arith.constant 1.000000e-30 : f32
    %157 = vector.broadcast %cst_51 : f32 to vector<32x128xf32>
    %158 = arith.maximumf %153, %157 : vector<32x128xf32>
    %159 = math.log %158 : vector<32x128xf32>
    %cst_52 = arith.constant 2.000000e-01 : f32
    %160 = vector.broadcast %cst_52 : f32 to vector<32x128xf32>
    %161 = arith.mulf %160, %159 : vector<32x128xf32>
    %162 = arith.subf %156, %161 : vector<32x128xf32>
    %cst_53 = arith.constant dense<0.000000e+00> : vector<32x128xf32>
    %163 = tpu.matmul %118, %108, %cst_53 {dimension_numbers = #tpu.dot_dimension_numbers<[1], [0], [0], [1], [0, 0, 1, 1], [], []>} : vector<32x32xf32>, vector<32x128xf32>, vector<32x128xf32> -> vector<32x128xf32>
    %164 = vector.broadcast %125 : vector<32x1xf32> to vector<32x128xf32>
    %165 = arith.addf %163, %164 : vector<32x128xf32>
    %cst_54 = arith.constant 5.000000e-01 : f32
    %166 = vector.broadcast %cst_54 : f32 to vector<32x128xf32>
    %167 = arith.mulf %166, %165 : vector<32x128xf32>
    %168 = math.tanh %167 : vector<32x128xf32>
    %cst_55 = arith.constant 5.000000e-01 : f32
    %169 = vector.broadcast %cst_55 : f32 to vector<32x128xf32>
    %170 = arith.mulf %169, %168 : vector<32x128xf32>
    %cst_56 = arith.constant 5.000000e-01 : f32
    %171 = vector.broadcast %cst_56 : f32 to vector<32x128xf32>
    %172 = arith.addf %170, %171 : vector<32x128xf32>
    %173 = arith.subf %145, %162 : vector<32x128xf32>
    %174 = arith.mulf %172, %173 : vector<32x128xf32>
    %cst_57 = arith.constant dense<0.000000e+00> : vector<32x128xf32>
    %175 = tpu.matmul %120, %174, %cst_57 {dimension_numbers = #tpu.dot_dimension_numbers<[1], [0], [0], [1], [0, 0, 1, 1], [], []>} : vector<32x32xf32>, vector<32x128xf32>, vector<32x128xf32> -> vector<32x128xf32>
    %cst_58 = arith.constant 1.000000e+00 : f32
    %176 = vector.broadcast %cst_58 : f32 to vector<32x128xf32>
    %177 = arith.subf %176, %172 : vector<32x128xf32>
    %178 = arith.mulf %177, %108 : vector<32x128xf32>
    %cst_59 = arith.constant dense<0.000000e+00> : vector<32x128xf32>
    %179 = tpu.matmul %122, %178, %cst_59 {dimension_numbers = #tpu.dot_dimension_numbers<[1], [0], [0], [1], [0, 0, 1, 1], [], []>} : vector<32x32xf32>, vector<32x128xf32>, vector<32x128xf32> -> vector<32x128xf32>
    %180 = arith.addf %175, %179 : vector<32x128xf32>
    %181 = vector.broadcast %126 : vector<32x1xf32> to vector<32x128xf32>
    %182 = arith.addf %180, %181 : vector<32x128xf32>
    %183 = arith.addf %108, %182 : vector<32x128xf32>
    %cst_60 = arith.constant dense<0.000000e+00> : vector<128xf32>
    %184 = vector.multi_reduction <add>, %183, %cst_60 [0] : vector<32x128xf32> to vector<128xf32>
    %185 = vector.shape_cast %184 : vector<128xf32> to vector<1x128xf32>
    %cst_61 = arith.constant 3.200000e+01 : f32
    %186 = vector.broadcast %cst_61 : f32 to vector<1x128xf32>
    %187 = arith.divf %185, %186 : vector<1x128xf32>
    %188 = vector.broadcast %187 : vector<1x128xf32> to vector<32x128xf32>
    %189 = arith.subf %183, %188 : vector<32x128xf32>
    %190 = arith.mulf %189, %189 : vector<32x128xf32>
    %cst_62 = arith.constant dense<0.000000e+00> : vector<128xf32>
    %191 = vector.multi_reduction <add>, %190, %cst_62 [0] : vector<32x128xf32> to vector<128xf32>
    %192 = vector.shape_cast %191 : vector<128xf32> to vector<1x128xf32>
    %cst_63 = arith.constant 3.200000e+01 : f32
    %193 = vector.broadcast %cst_63 : f32 to vector<1x128xf32>
    %194 = arith.divf %192, %193 : vector<1x128xf32>
    %cst_64 = arith.constant 9.99999974E-6 : f32
    %195 = vector.broadcast %cst_64 : f32 to vector<1x128xf32>
    %196 = arith.addf %194, %195 : vector<1x128xf32>
    %197 = math.rsqrt %196 : vector<1x128xf32>
    %198 = vector.broadcast %197 : vector<1x128xf32> to vector<32x128xf32>
    %199 = arith.mulf %189, %198 : vector<32x128xf32>
    %200 = vector.broadcast %127 : vector<32x1xf32> to vector<32x128xf32>
    %201 = arith.mulf %199, %200 : vector<32x128xf32>
    %202 = vector.broadcast %128 : vector<32x1xf32> to vector<32x128xf32>
    %203 = arith.addf %201, %202 : vector<32x128xf32>
    %c0_65 = arith.constant 0 : index
    %c0_66 = arith.constant 0 : index
    %204 = vector.load %arg6[%c0_65, %c0_66] : memref<4x32xf32, #tpu.memory_space<vmem>>, vector<4x32xf32>
    %cst_67 = arith.constant dense<0.000000e+00> : vector<4x128xf32>
    %205 = tpu.matmul %204, %203, %cst_67 {dimension_numbers = #tpu.dot_dimension_numbers<[1], [0], [0], [1], [0, 0, 1, 1], [], []>} : vector<4x32xf32>, vector<32x128xf32>, vector<4x128xf32> -> vector<4x128xf32>
    %c0_68 = arith.constant 0 : index
    %c0_69 = arith.constant 0 : index
    %206 = vector.load %arg7[%c0_68, %c0_69] : memref<4x1xf32, #tpu.memory_space<vmem>>, vector<4x1xf32>
    %207 = vector.broadcast %206 : vector<4x1xf32> to vector<4x128xf32>
    %208 = arith.addf %205, %207 : vector<4x128xf32>
    %c0_70 = arith.constant 0 : index
    %c0_71 = arith.constant 0 : index
    %209 = vector.load %arg8[%c0_70, %c0_71] : memref<4x128xf32, #tpu.memory_space<vmem>>, vector<4x128xf32>
    tpu.vector_store %arg8[%c0_70, %c0_71], %208 {strides = array<i32>} : memref<4x128xf32, #tpu.memory_space<vmem>>, vector<4x128xf32>,
    return
  }
  func.func @transform_0(%arg0: i32) -> (i32, i32) {
    %c0_i32 = arith.constant 0 : i32
    %c0_i32_0 = arith.constant 0 : i32
    return %c0_i32, %arg0 : i32, i32
  }
  func.func @transform_1(%arg0: i32) -> (i32, i32) {
    %c0_i32 = arith.constant 0 : i32
    %c0_i32_0 = arith.constant 0 : i32
    %c0_i32_1 = arith.constant 0 : i32
    return %c0_i32, %c0_i32_0 : i32, i32
  }
  func.func @transform_2(%arg0: i32) -> (i32, i32) {
    %c0_i32 = arith.constant 0 : i32
    %c0_i32_0 = arith.constant 0 : i32
    %c0_i32_1 = arith.constant 0 : i32
    return %c0_i32, %c0_i32_0 : i32, i32
  }
  func.func @transform_3(%arg0: i32) -> (i32, i32, i32, i32) {
    %c0_i32 = arith.constant 0 : i32
    %c0_i32_0 = arith.constant 0 : i32
    %c0_i32_1 = arith.constant 0 : i32
    %c0_i32_2 = arith.constant 0 : i32
    %c0_i32_3 = arith.constant 0 : i32
    return %c0_i32, %c0_i32_0, %c0_i32_1, %c0_i32_2 : i32, i32, i32, i32
  }
  func.func @transform_4(%arg0: i32) -> (i32, i32, i32) {
    %c0_i32 = arith.constant 0 : i32
    %c0_i32_0 = arith.constant 0 : i32
    %c0_i32_1 = arith.constant 0 : i32
    %c0_i32_2 = arith.constant 0 : i32
    return %c0_i32, %c0_i32_0, %c0_i32_1 : i32, i32, i32
  }
  func.func @transform_5(%arg0: i32) -> (i32, i32) {
    %c0_i32 = arith.constant 0 : i32
    %c0_i32_0 = arith.constant 0 : i32
    %c0_i32_1 = arith.constant 0 : i32
    return %c0_i32, %c0_i32_0 : i32, i32
  }
  func.func @transform_6(%arg0: i32) -> (i32, i32) {
    %c0_i32 = arith.constant 0 : i32
    %c0_i32_0 = arith.constant 0 : i32
    %c0_i32_1 = arith.constant 0 : i32
    return %c0_i32, %c0_i32_0 : i32, i32
  }
  func.func @transform_7(%arg0: i32) -> (i32, i32) {
    %c0_i32 = arith.constant 0 : i32
    %c0_i32_0 = arith.constant 0 : i32
    return %c0_i32, %arg0 : i32, i32
  }
}

</mosaic_0001>

<llo_original>
// kernel: prototype_rune_net.1
$region0: #{prototype_rune_net.1}
  #allocation0 [shape = 'u32[]', space=smem, size = 0x4, offset = 0x4, fixed_abs, tag = 'smem constant byte address 0x4 - core index']
  #allocation1 [shape = 'u32[144,128]{1,0:T(1,128)}', space=vmem, size = 0x12000, scoped, tag = 'internal scratch']
  %s0 = inlined_call_operand.vmem [shape: f32[16,128], index: 0, kind: input, shape index: {}]
  %s1 = inlined_call_operand.vmem [shape: f32[32,16], index: 1, kind: input, shape index: {}]
  %s2 = inlined_call_operand.vmem [shape: f32[32,2], index: 2, kind: input, shape index: {}]
  %s3 = inlined_call_operand.hbm [shape: f32[2,5,32,32], index: 3, kind: input, shape index: {}]
  %s4 = inlined_call_operand.vmem [shape: f32[2,32,6], index: 4, kind: input, shape index: {}]
  %s5 = inlined_call_operand.vmem [shape: f32[4,32], index: 5, kind: input, shape index: {}]
  %s6 = inlined_call_operand.vmem [shape: f32[4,1], index: 6, kind: input, shape index: {}]
  %s7 = inlined_call_operand.vmem [shape: f32[4,128], index: 7, kind: output, shape index: {}]
  %s8 = sld [smem:[#allocation0]]
  $region42: #{prototype_rune_net.1} parent=0
    _
  %s10 = ssub.s32 1, %s8
  %s11 = scalar_select 0, %s10, %s8
  $region1: #{prototype_rune_net.1} parent=0
    #allocation2 [shape = 'u8[163840]{0}', space=vmem, size = 0x28000, scoped, tag = 'input window, operand 3, single buffered']
    #allocation3 [shape = 's32[1]{0}', space=sflag, size = 0x4, scoped, tag = 'scoped memory for prototype_rune_net.1']
    %12 = vsyncpa [#allocation3], 0
    // Predicated region
    $region2: #{prototype_rune_net.1} parent=1 // pred_check
      _
    $region3: #{prototype_rune_net.1} parent=1 // pred_check_branch
      %14 = sbr.rel (0) target = $region5
    $region4: #{prototype_rune_net.1} parent=1 // pred_region
      _
    $region5: #{prototype_rune_net.1} parent=1 // pred_fallthru
      _
    // Predicated region
    $region6: #{prototype_rune_net.1} parent=1 // pred_check
      _
    $region7: #{prototype_rune_net.1} parent=1 // pred_check_branch
      %16 = sbr.rel (0) target = $region9
    $region8: #{prototype_rune_net.1} parent=1 // pred_region
      _
    $region9: #{prototype_rune_net.1} parent=1 // pred_fallthru
      _
    // Predicated region
    $region10: #{prototype_rune_net.1} parent=1 // pred_check
      _
    $region11: #{prototype_rune_net.1} parent=1 // pred_check_branch
      %18 = sbr.rel (0) target = $region13
    $region12: #{prototype_rune_net.1} parent=1 // pred_region
      _
    $region13: #{prototype_rune_net.1} parent=1 // pred_fallthru
      _
    // Predicated region
    $region14: #{prototype_rune_net.1} parent=1 // pred_check
      _
    $region15: #{prototype_rune_net.1} parent=1 // pred_check_branch
      %20 = sbr.rel (0) target = $region17
    $region16: #{prototype_rune_net.1} parent=1 // pred_region
      %s22 = ssub.s32 5120, 5120
      %23 = vsyncadd [#allocation3], %s22
      %s24 = sshll.u32 [#allocation2], 4
      %s25 = int_to_ptr.vmem [resolvable:$true] %s24
      %30 = dma.hbm_to_vmem [thread:$0]  %s3, 5120, %s25, [#allocation3], 128, 128, 8
    $region17: #{prototype_rune_net.1} parent=1 // pred_fallthru
      _
    // Predicated region
    $region18: #{prototype_rune_net.1} parent=1 // pred_check
      _
    $region19: #{prototype_rune_net.1} parent=1 // pred_check_branch
      %32 = sbr.rel (0) target = $region21
    $region20: #{prototype_rune_net.1} parent=1 // pred_region
      _
    $region21: #{prototype_rune_net.1} parent=1 // pred_fallthru
      _
    // Predicated region
    $region22: #{prototype_rune_net.1} parent=1 // pred_check
      _
    $region23: #{prototype_rune_net.1} parent=1 // pred_check_branch
      %34 = sbr.rel (0) target = $region25
    $region24: #{prototype_rune_net.1} parent=1 // pred_region
      _
    $region25: #{prototype_rune_net.1} parent=1 // pred_fallthru
      _
    // Predicated region
    $region26: #{prototype_rune_net.1} parent=1 // pred_check
      _
    $region27: #{prototype_rune_net.1} parent=1 // pred_check_branch
      %36 = sbr.rel (0) target = $region29
    $region28: #{prototype_rune_net.1} parent=1 // pred_region
      _
    $region29: #{prototype_rune_net.1} parent=1 // pred_fallthru
      _
    // Predicated region
    $region30: #{prototype_rune_net.1} parent=1 // pred_check
      _
    $region31: #{prototype_rune_net.1} parent=1 // pred_check_branch
      %38 = sbr.rel (0) target = $region33
    $region32: #{prototype_rune_net.1} parent=1 // pred_region
      %39 = dma.done [#allocation3], 5120
    $region33: #{prototype_rune_net.1} parent=1 // pred_fallthru
      _
    %v40 = vld [vmem:[%s0] sm:$0xff]
    %v41 = vld [vmem:[%s0 + $0x8] sm:$0xff]
    %v42 = vld [vmem:[%s2] sm:$0xff]
    %v43 = vld [vmem:[%s2 + $0x8] sm:$0xff]
    %v44 = vld [vmem:[%s2 + $0x10] sm:$0xff]
    %v45 = vld [vmem:[%s2 + $0x18] sm:$0xff]
    %v46 = vmul.f32 %v40, %v40
    %v47 = vmul.f32 %v41, %v41
    %v48 = vadd.f32 %v46, %v47
    %v49 = vrot.slane %v48, 4
    %v50 = vadd.f32 %v48, %v49
    %v51 = vrot.slane %v50, 2
    %v52 = vadd.f32 %v50, %v51
    %v53 = vrot.slane %v52, 1
    %v54 = vadd.f32 %v52, %v53
    %v55 = vld [vmem:[%s1] sm:$0xff]
    %v56 = vld [vmem:[%s1 + $0x8] sm:$0xff]
    %v57 = vld [vmem:[%s1 + $0x10] sm:$0xff]
    %v58 = vld [vmem:[%s1 + $0x18] sm:$0xff]
    %60 = vset.pattern.permute.xlu0 0
    %61 = vperm.xlu0 %60, %v42
    %v62 = vpop.permute.xlu0 %61
    %65 = vset.pattern.permute.xlu0 0
    %66 = vperm.xlu0 %65, %v43
    %v67 = vpop.permute.xlu0 %66
    %70 = vset.pattern.permute.xlu0 0
    %71 = vperm.xlu0 %70, %v44
    %v72 = vpop.permute.xlu0 %71
    %75 = vset.pattern.permute.xlu0 0
    %76 = vperm.xlu0 %75, %v45
    %v77 = vpop.permute.xlu0 %76
    %v79 = vmul.f32 %v62, %v54
    %v80 = vmul.f32 %v67, %v54
    %v81 = vmul.f32 %v72, %v54
    %v82 = vmul.f32 %v77, %v54
    %vm83 = vcmask 130048
    %v85 = vsel %vm83, %v55, 0
    %v88 = vsel %vm83, %v56, 0
    %v91 = vsel %vm83, %v57, 0
    %v94 = vsel %vm83, %v58, 0
    %96 = vmatprep.subr.mxu0 0.0
    %97 = vmatpush1.msra.mxu0 0.0
    %98 = vmatprep.subr.mxu0 0.0
    %99 = vmatpush1.msra.mxu0 0.0
    %100 = vmatprep.subr.mxu0 0.0
    %101 = vmatpush1.msra.mxu0 0.0
    %102 = vmatprep.subr.mxu0 0.0
    %103 = vmatpush1.msra.mxu0 0.0
    %104 = vmatprep.subr.mxu0 0.0
    %105 = vmatpush1.msra.mxu0 0.0
    %106 = vmatprep.subr.mxu0 0.0
    %107 = vmatpush1.msra.mxu0 0.0
    %108 = vmatprep.subr.mxu0 0.0
    %109 = vmatpush1.msra.mxu0 0.0
    %110 = vmatprep.subr.mxu0 0.0
    %111 = vmatpush1.msra.mxu0 0.0
    %112 = vmatprep.subr.mxu0 0.0
    %113 = vmatpush1.msra.mxu0 0.0
    %114 = vmatprep.subr.mxu0 0.0
    %115 = vmatpush1.msra.mxu0 0.0
    %116 = vmatprep.subr.mxu0 0.0
    %117 = vmatpush1.msra.mxu0 0.0
    %118 = vmatprep.subr.mxu0 0.0
    %119 = vmatpush1.msra.mxu0 0.0
    %120 = vmatprep.subr.mxu0 0.0
    %121 = vmatpush1.msra.mxu0 0.0
    %122 = vmatprep.subr.mxu0 0.0
    %123 = vmatpush1.msra.mxu0 0.0
    %124 = vmatprep.subr.mxu0 0.0
    %125 = vmatpush1.msra.mxu0 %v41
    %126 = vmatprep.subr.mxu0 0.0
    %127 = vmatpush1.msra.mxu0 %v40
    %128 = vmatprep.subr.mxu0 0.0
    %129 = vmatpush2.msra.mxu0 0.0
    %130 = vmatprep.subr.mxu0 0.0
    %131 = vmatpush2.msra.mxu0 0.0
    %132 = vmatprep.subr.mxu0 0.0
    %133 = vmatpush2.msra.mxu0 0.0
    %134 = vmatprep.subr.mxu0 0.0
    %135 = vmatpush2.msra.mxu0 0.0
    %136 = vmatprep.subr.mxu0 0.0
    %137 = vmatpush2.msra.mxu0 0.0
    %138 = vmatprep.subr.mxu0 0.0
    %139 = vmatpush2.msra.mxu0 0.0
    %140 = vmatprep.subr.mxu0 0.0
    %141 = vmatpush2.msra.mxu0 0.0
    %142 = vmatprep.subr.mxu0 0.0
    %143 = vmatpush2.msra.mxu0 0.0
    %144 = vmatprep.subr.mxu0 0.0
    %145 = vmatpush2.msra.mxu0 0.0
    %146 = vmatprep.subr.mxu0 0.0
    %147 = vmatpush2.msra.mxu0 0.0
    %148 = vmatprep.subr.mxu0 0.0
    %149 = vmatpush2.msra.mxu0 0.0
    %150 = vmatprep.subr.mxu0 0.0
    %151 = vmatpush2.msra.mxu0 0.0
    %152 = vmatprep.subr.mxu0 0.0
    %153 = vmatpush2.msra.mxu0 0.0
    %154 = vmatprep.subr.mxu0 0.0
    %155 = vmatpush2.msra.mxu0 0.0
    %156 = vmatprep.subr.mxu0 0.0
    %157 = vmatpush2.msra.mxu0 0.0
    %158 = vmatprep.subr.mxu0 0.0
    %159 = vmatpush2.msra.mxu0 0.0
    %160 = vmatprep.mubr.f32.mxu0 0.0
    %161 = vmatmul.mubr.f32.gmra.mxu0 %v85
    %v162 = vpop.f32.mrf.mxu0
    %v163 = vadd.f32 %v79, %v162
    %v164 = vpop.f32.mrf.mxu0
    %165 = vmatprep.mubr.f32.mxu0 0.0
    %166 = vmatmul.mubr.f32.gmra.mxu0 %v88
    %v167 = vpop.f32.mrf.mxu0
    %v168 = vadd.f32 %v80, %v167
    %v169 = vpop.f32.mrf.mxu0
    %170 = vmatprep.mubr.f32.mxu0 0.0
    %171 = vmatmul.mubr.f32.gmra.mxu0 %v91
    %v172 = vpop.f32.mrf.mxu0
    %v173 = vadd.f32 %v81, %v172
    %v174 = vpop.f32.mrf.mxu0
    %175 = vmatprep.mubr.f32.mxu0 0.0
    %176 = vmatmul.mubr.f32.gmra.mxu0 %v94
    %v177 = vpop.f32.mrf.mxu0
    %v178 = vadd.f32 %v82, %v177
    %v179 = vpop.f32.mrf.mxu0
    %180 = vdwg.mxu0
    %181 = vset.pattern.permute.xlu0 1
    %182 = vperm.xlu0 %181, %v42
    %v183 = vpop.permute.xlu0 %182
    %185 = vset.pattern.permute.xlu0 1
    %186 = vperm.xlu0 %185, %v43
    %v187 = vpop.permute.xlu0 %186
    %189 = vset.pattern.permute.xlu0 1
    %190 = vperm.xlu0 %189, %v44
    %v191 = vpop.permute.xlu0 %190
    %193 = vset.pattern.permute.xlu0 1
    %194 = vperm.xlu0 %193, %v45
    %v195 = vpop.permute.xlu0 %194
    %v197 = vadd.f32 %v163, %v183
    %v198 = vadd.f32 %v168, %v187
    %v199 = vadd.f32 %v173, %v191
    %v200 = vadd.f32 %v178, %v195
    %v201 = vld [vmem:[#allocation2] sm:$0xff]
    %v202 = vld [vmem:[#allocation2 + $0x8] sm:$0xff]
    %v203 = vld [vmem:[#allocation2 + $0x10] sm:$0xff]
    %v204 = vld [vmem:[#allocation2 + $0x18] sm:$0xff]
    %v205 = vld [vmem:[#allocation2 + $0x20] sm:$0xff]
    %v206 = vld [vmem:[#allocation2 + $0x28] sm:$0xff]
    %v207 = vld [vmem:[#allocation2 + $0x30] sm:$0xff]
    %v208 = vld [vmem:[#allocation2 + $0x38] sm:$0xff]
    %v209 = vld [vmem:[#allocation2 + $0x40] sm:$0xff]
    %v210 = vld [vmem:[#allocation2 + $0x48] sm:$0xff]
    %v211 = vld [vmem:[#allocation2 + $0x50] sm:$0xff]
    %v212 = vld [vmem:[#allocation2 + $0x58] sm:$0xff]
    %v213 = vld [vmem:[#allocation2 + $0x60] sm:$0xff]
    %v214 = vld [vmem:[#allocation2 + $0x68] sm:$0xff]
    %v215 = vld [vmem:[#allocation2 + $0x70] sm:$0xff]
    %v216 = vld [vmem:[#allocation2 + $0x78] sm:$0xff]
    %v217 = vld [vmem:[#allocation2 + $0x80] sm:$0xff]
    %v218 = vld [vmem:[#allocation2 + $0x88] sm:$0xff]
    %v219 = vld [vmem:[#allocation2 + $0x90] sm:$0xff]
    %v220 = vld [vmem:[#allocation2 + $0x98] sm:$0xff]
    %v221 = vld [vmem:[%s4] sm:$0xff]
    %v222 = vld [vmem:[%s4 + $0x8] sm:$0xff]
    %v223 = vld [vmem:[%s4 + $0x10] sm:$0xff]
    %v224 = vld [vmem:[%s4 + $0x18] sm:$0xff]
    %v225 = vmax.f32 %v197, %v198
    %v226 = vmax.f32 %v199, %v200
    %v227 = vmax.f32 %v225, %v226
    %v228 = vrot.slane %v227, 4
    %v229 = vmax.f32 %v227, %v228
    %v230 = vrot.slane %v229, 2
    %v231 = vmax.f32 %v229, %v230
    %v232 = vrot.slane %v231, 1
    %v233 = vmax.f32 %v231, %v232
    %v234 = vsub.f32 %v197, %v233
    %v235 = vsub.f32 %v198, %v233
    %v236 = vsub.f32 %v199, %v233
    %v237 = vsub.f32 %v200, %v233
    %v238 = vmul.f32 %v234, 5.0
    %v239 = vmul.f32 %v235, 5.0
    %v240 = vmul.f32 %v236, 5.0
    %v241 = vmul.f32 %v237, 5.0
    %v242 = vmul.f32 %v238, 1.442695
    %v243 = vpow.pop %v242
    %v244 = vmul.f32 %v239, 1.442695
    %v245 = vpow.pop %v244
    %v246 = vmul.f32 %v240, 1.442695
    %v247 = vpow.pop %v246
    %v248 = vmul.f32 %v241, 1.442695
    %v249 = vpow.pop %v248
    %vm250 = vcmask 261120
    %v252 = vsel %vm250, %v201, 0
    %v255 = vsel %vm250, %v202, 0
    %v258 = vsel %vm250, %v203, 0
    %v261 = vsel %vm250, %v204, 0
    %263 = vmatprep.subr.mxu0 0.0
    %264 = vmatpush1.msra.mxu0 0.0
    %265 = vmatprep.subr.mxu0 0.0
    %266 = vmatpush1.msra.mxu0 0.0
    %267 = vmatprep.subr.mxu0 0.0
    %268 = vmatpush1.msra.mxu0 0.0
    %269 = vmatprep.subr.mxu0 0.0
    %270 = vmatpush1.msra.mxu0 0.0
    %271 = vmatprep.subr.mxu0 0.0
    %272 = vmatpush1.msra.mxu0 0.0
    %273 = vmatprep.subr.mxu0 0.0
    %274 = vmatpush1.msra.mxu0 0.0
    %275 = vmatprep.subr.mxu0 0.0
    %276 = vmatpush1.msra.mxu0 0.0
    %277 = vmatprep.subr.mxu0 0.0
    %278 = vmatpush1.msra.mxu0 0.0
    %279 = vmatprep.subr.mxu0 0.0
    %280 = vmatpush1.msra.mxu0 0.0
    %281 = vmatprep.subr.mxu0 0.0
    %282 = vmatpush1.msra.mxu0 0.0
    %283 = vmatprep.subr.mxu0 0.0
    %284 = vmatpush1.msra.mxu0 0.0
    %285 = vmatprep.subr.mxu0 0.0
    %286 = vmatpush1.msra.mxu0 0.0
    %287 = vmatprep.subr.mxu0 0.0
    %288 = vmatpush1.msra.mxu0 %v249
    %289 = vmatprep.subr.mxu0 0.0
    %290 = vmatpush1.msra.mxu0 %v247
    %291 = vmatprep.subr.mxu0 0.0
    %292 = vmatpush1.msra.mxu0 %v245
    %293 = vmatprep.subr.mxu0 0.0
    %294 = vmatpush1.msra.mxu0 %v243
    %295 = vmatprep.subr.mxu0 0.0
    %296 = vmatpush2.msra.mxu0 0.0
    %297 = vmatprep.subr.mxu0 0.0
    %298 = vmatpush2.msra.mxu0 0.0
    %299 = vmatprep.subr.mxu0 0.0
    %300 = vmatpush2.msra.mxu0 0.0
    %301 = vmatprep.subr.mxu0 0.0
    %302 = vmatpush2.msra.mxu0 0.0
    %303 = vmatprep.subr.mxu0 0.0
    %304 = vmatpush2.msra.mxu0 0.0
    %305 = vmatprep.subr.mxu0 0.0
    %306 = vmatpush2.msra.mxu0 0.0
    %307 = vmatprep.subr.mxu0 0.0
    %308 = vmatpush2.msra.mxu0 0.0
    %309 = vmatprep.subr.mxu0 0.0
    %310 = vmatpush2.msra.mxu0 0.0
    %311 = vmatprep.subr.mxu0 0.0
    %312 = vmatpush2.msra.mxu0 0.0
    %313 = vmatprep.subr.mxu0 0.0
    %314 = vmatpush2.msra.mxu0 0.0
    %315 = vmatprep.subr.mxu0 0.0
    %316 = vmatpush2.msra.mxu0 0.0
    %317 = vmatprep.subr.mxu0 0.0
    %318 = vmatpush2.msra.mxu0 0.0
    %319 = vmatprep.subr.mxu0 0.0
    %320 = vmatpush2.msra.mxu0 0.0
    %321 = vmatprep.subr.mxu0 0.0
    %322 = vmatpush2.msra.mxu0 0.0
    %323 = vmatprep.subr.mxu0 0.0
    %324 = vmatpush2.msra.mxu0 0.0
    %325 = vmatprep.subr.mxu0 0.0
    %326 = vmatpush2.msra.mxu0 0.0
    %327 = vmatprep.mubr.f32.mxu0 0.0
    %328 = vmatmul.mubr.f32.gmra.mxu0 %v252
    %v329 = vpop.f32.mrf.mxu0
    %v330 = vadd.f32 0.0, %v329
    %v331 = vpop.f32.mrf.mxu0
    %332 = vmatprep.mubr.f32.mxu0 0.0
    %333 = vmatmul.mubr.f32.gmra.mxu0 %v255
    %v334 = vpop.f32.mrf.mxu0
    %v335 = vadd.f32 0.0, %v334
    %v336 = vpop.f32.mrf.mxu0
    %337 = vmatprep.mubr.f32.mxu0 0.0
    %338 = vmatmul.mubr.f32.gmra.mxu0 %v258
    %v339 = vpop.f32.mrf.mxu0
    %v340 = vadd.f32 0.0, %v339
    %v341 = vpop.f32.mrf.mxu0
    %342 = vmatprep.mubr.f32.mxu0 0.0
    %343 = vmatmul.mubr.f32.gmra.mxu0 %v261
    %v344 = vpop.f32.mrf.mxu0
    %v345 = vadd.f32 0.0, %v344
    %v346 = vpop.f32.mrf.mxu0
    %347 = vdwg.mxu0
    %349 = vset.pattern.permute.xlu0 0
    %350 = vperm.xlu0 %349, %v221
    %v351 = vpop.permute.xlu0 %350
    %354 = vset.pattern.permute.xlu0 0
    %355 = vperm.xlu0 %354, %v222
    %v356 = vpop.permute.xlu0 %355
    %359 = vset.pattern.permute.xlu0 0
    %360 = vperm.xlu0 %359, %v223
    %v361 = vpop.permute.xlu0 %360
    %364 = vset.pattern.permute.xlu0 0
    %365 = vperm.xlu0 %364, %v224
    %v366 = vpop.permute.xlu0 %365
    %v368 = vadd.f32 %v233, %v351
    %v369 = vadd.f32 %v233, %v356
    %v370 = vadd.f32 %v233, %v361
    %v371 = vadd.f32 %v233, %v366
    %v372 = vmax.f32 %v330, 1e-30
    %v373 = vmax.f32 %v335, 1e-30
    %v374 = vmax.f32 %v340, 1e-30
    %v375 = vmax.f32 %v345, 1e-30
    %v376 = vlog2.pop %v372
    %v377 = vmul.f32 %v376, 0.6931472
    %v378 = vlog2.pop %v373
    %v379 = vmul.f32 %v378, 0.6931472
    %v380 = vlog2.pop %v374
    %v381 = vmul.f32 %v380, 0.6931472
    %v382 = vlog2.pop %v375
    %v383 = vmul.f32 %v382, 0.6931472
    %v384 = vmul.f32 %v377, 0.2
    %v385 = vmul.f32 %v379, 0.2
    %v386 = vmul.f32 %v381, 0.2
    %v387 = vmul.f32 %v383, 0.2
    %v388 = vadd.f32 %v368, %v384
    %v389 = vadd.f32 %v369, %v385
    %v390 = vadd.f32 %v370, %v386
    %v391 = vadd.f32 %v371, %v387
    %v392 = vmin.f32 %v197, %v198
    %v393 = vmin.f32 %v199, %v200
    %v394 = vmin.f32 %v392, %v393
    %v395 = vrot.slane %v394, 4
    %v396 = vmin.f32 %v394, %v395
    %v397 = vrot.slane %v396, 2
    %v398 = vmin.f32 %v396, %v397
    %v399 = vrot.slane %v398, 1
    %v400 = vmin.f32 %v398, %v399
    %v401 = vsub.f32 %v400, %v197
    %v402 = vsub.f32 %v400, %v198
    %v403 = vsub.f32 %v400, %v199
    %v404 = vsub.f32 %v400, %v200
    %v405 = vmul.f32 %v401, 5.0
    %v406 = vmul.f32 %v402, 5.0
    %v407 = vmul.f32 %v403, 5.0
    %v408 = vmul.f32 %v404, 5.0
    %v409 = vmul.f32 %v405, 1.442695
    %v410 = vpow.pop %v409
    %v411 = vmul.f32 %v406, 1.442695
    %v412 = vpow.pop %v411
    %v413 = vmul.f32 %v407, 1.442695
    %v414 = vpow.pop %v413
    %v415 = vmul.f32 %v408, 1.442695
    %v416 = vpow.pop %v415
    %v418 = vsel %vm250, %v205, 0
    %v421 = vsel %vm250, %v206, 0
    %v424 = vsel %vm250, %v207, 0
    %v427 = vsel %vm250, %v208, 0
    %429 = vmatprep.subr.mxu0 0.0
    %430 = vmatpush1.msra.mxu0 0.0
    %431 = vmatprep.subr.mxu0 0.0
    %432 = vmatpush1.msra.mxu0 0.0
    %433 = vmatprep.subr.mxu0 0.0
    %434 = vmatpush1.msra.mxu0 0.0
    %435 = vmatprep.subr.mxu0 0.0
    %436 = vmatpush1.msra.mxu0 0.0
    %437 = vmatprep.subr.mxu0 0.0
    %438 = vmatpush1.msra.mxu0 0.0
    %439 = vmatprep.subr.mxu0 0.0
    %440 = vmatpush1.msra.mxu0 0.0
    %441 = vmatprep.subr.mxu0 0.0
    %442 = vmatpush1.msra.mxu0 0.0
    %443 = vmatprep.subr.mxu0 0.0
    %444 = vmatpush1.msra.mxu0 0.0
    %445 = vmatprep.subr.mxu0 0.0
    %446 = vmatpush1.msra.mxu0 0.0
    %447 = vmatprep.subr.mxu0 0.0
    %448 = vmatpush1.msra.mxu0 0.0
    %449 = vmatprep.subr.mxu0 0.0
    %450 = vmatpush1.msra.mxu0 0.0
    %451 = vmatprep.subr.mxu0 0.0
    %452 = vmatpush1.msra.mxu0 0.0
    %453 = vmatprep.subr.mxu0 0.0
    %454 = vmatpush1.msra.mxu0 %v416
    %455 = vmatprep.subr.mxu0 0.0
    %456 = vmatpush1.msra.mxu0 %v414
    %457 = vmatprep.subr.mxu0 0.0
    %458 = vmatpush1.msra.mxu0 %v412
    %459 = vmatprep.subr.mxu0 0.0
    %460 = vmatpush1.msra.mxu0 %v410
    %461 = vmatprep.subr.mxu0 0.0
    %462 = vmatpush2.msra.mxu0 0.0
    %463 = vmatprep.subr.mxu0 0.0
    %464 = vmatpush2.msra.mxu0 0.0
    %465 = vmatprep.subr.mxu0 0.0
    %466 = vmatpush2.msra.mxu0 0.0
    %467 = vmatprep.subr.mxu0 0.0
    %468 = vmatpush2.msra.mxu0 0.0
    %469 = vmatprep.subr.mxu0 0.0
    %470 = vmatpush2.msra.mxu0 0.0
    %471 = vmatprep.subr.mxu0 0.0
    %472 = vmatpush2.msra.mxu0 0.0
    %473 = vmatprep.subr.mxu0 0.0
    %474 = vmatpush2.msra.mxu0 0.0
    %475 = vmatprep.subr.mxu0 0.0
    %476 = vmatpush2.msra.mxu0 0.0
    %477 = vmatprep.subr.mxu0 0.0
    %478 = vmatpush2.msra.mxu0 0.0
    %479 = vmatprep.subr.mxu0 0.0
    %480 = vmatpush2.msra.mxu0 0.0
    %481 = vmatprep.subr.mxu0 0.0
    %482 = vmatpush2.msra.mxu0 0.0
    %483 = vmatprep.subr.mxu0 0.0
    %484 = vmatpush2.msra.mxu0 0.0
    %485 = vmatprep.subr.mxu0 0.0
    %486 = vmatpush2.msra.mxu0 0.0
    %487 = vmatprep.subr.mxu0 0.0
    %488 = vmatpush2.msra.mxu0 0.0
    %489 = vmatprep.subr.mxu0 0.0
    %490 = vmatpush2.msra.mxu0 0.0
    %491 = vmatprep.subr.mxu0 0.0
    %492 = vmatpush2.msra.mxu0 0.0
    %493 = vmatprep.mubr.f32.mxu0 0.0
    %494 = vmatmul.mubr.f32.gmra.mxu0 %v418
    %v495 = vpop.f32.mrf.mxu0
    %v496 = vadd.f32 0.0, %v495
    %v497 = vpop.f32.mrf.mxu0
    %498 = vmatprep.mubr.f32.mxu0 0.0
    %499 = vmatmul.mubr.f32.gmra.mxu0 %v421
    %v500 = vpop.f32.mrf.mxu0
    %v501 = vadd.f32 0.0, %v500
    %v502 = vpop.f32.mrf.mxu0
    %503 = vmatprep.mubr.f32.mxu0 0.0
    %504 = vmatmul.mubr.f32.gmra.mxu0 %v424
    %v505 = vpop.f32.mrf.mxu0
    %v506 = vadd.f32 0.0, %v505
    %v507 = vpop.f32.mrf.mxu0
    %508 = vmatprep.mubr.f32.mxu0 0.0
    %509 = vmatmul.mubr.f32.gmra.mxu0 %v427
    %v510 = vpop.f32.mrf.mxu0
    %v511 = vadd.f32 0.0, %v510
    %v512 = vpop.f32.mrf.mxu0
    %513 = vdwg.mxu0
    %514 = vset.pattern.permute.xlu0 1
    %515 = vperm.xlu0 %514, %v221
    %v516 = vpop.permute.xlu0 %515
    %518 = vset.pattern.permute.xlu0 1
    %519 = vperm.xlu0 %518, %v222
    %v520 = vpop.permute.xlu0 %519
    %522 = vset.pattern.permute.xlu0 1
    %523 = vperm.xlu0 %522, %v223
    %v524 = vpop.permute.xlu0 %523
    %526 = vset.pattern.permute.xlu0 1
    %527 = vperm.xlu0 %526, %v224
    %v528 = vpop.permute.xlu0 %527
    %v530 = vadd.f32 %v400, %v516
    %v531 = vadd.f32 %v400, %v520
    %v532 = vadd.f32 %v400, %v524
    %v533 = vadd.f32 %v400, %v528
    %v534 = vmax.f32 %v496, 1e-30
    %v535 = vmax.f32 %v501, 1e-30
    %v536 = vmax.f32 %v506, 1e-30
    %v537 = vmax.f32 %v511, 1e-30
    %v538 = vlog2.pop %v534
    %v539 = vmul.f32 %v538, 0.6931472
    %v540 = vlog2.pop %v535
    %v541 = vmul.f32 %v540, 0.6931472
    %v542 = vlog2.pop %v536
    %v543 = vmul.f32 %v542, 0.6931472
    %v544 = vlog2.pop %v537
    %v545 = vmul.f32 %v544, 0.6931472
    %v546 = vmul.f32 %v539, 0.2
    %v547 = vmul.f32 %v541, 0.2
    %v548 = vmul.f32 %v543, 0.2
    %v549 = vmul.f32 %v545, 0.2
    %v550 = vsub.f32 %v530, %v546
    %v551 = vsub.f32 %v531, %v547
    %v552 = vsub.f32 %v532, %v548
    %v553 = vsub.f32 %v533, %v549
    %554 = vset.pattern.permute.xlu0 2
    %555 = vperm.xlu0 %554, %v221
    %v556 = vpop.permute.xlu0 %555
    %558 = vset.pattern.permute.xlu0 2
    %559 = vperm.xlu0 %558, %v222
    %v560 = vpop.permute.xlu0 %559
    %562 = vset.pattern.permute.xlu0 2
    %563 = vperm.xlu0 %562, %v223
    %v564 = vpop.permute.xlu0 %563
    %566 = vset.pattern.permute.xlu0 2
    %567 = vperm.xlu0 %566, %v224
    %v568 = vpop.permute.xlu0 %567
    %v571 = vsel %vm250, %v209, 0
    %v574 = vsel %vm250, %v210, 0
    %v577 = vsel %vm250, %v211, 0
    %v580 = vsel %vm250, %v212, 0
    %582 = vmatprep.subr.mxu0 0.0
    %583 = vmatpush1.msra.mxu0 0.0
    %584 = vmatprep.subr.mxu0 0.0
    %585 = vmatpush1.msra.mxu0 0.0
    %586 = vmatprep.subr.mxu0 0.0
    %587 = vmatpush1.msra.mxu0 0.0
    %588 = vmatprep.subr.mxu0 0.0
    %589 = vmatpush1.msra.mxu0 0.0
    %590 = vmatprep.subr.mxu0 0.0
    %591 = vmatpush1.msra.mxu0 0.0
    %592 = vmatprep.subr.mxu0 0.0
    %593 = vmatpush1.msra.mxu0 0.0
    %594 = vmatprep.subr.mxu0 0.0
    %595 = vmatpush1.msra.mxu0 0.0
    %596 = vmatprep.subr.mxu0 0.0
    %597 = vmatpush1.msra.mxu0 0.0
    %598 = vmatprep.subr.mxu0 0.0
    %599 = vmatpush1.msra.mxu0 0.0
    %600 = vmatprep.subr.mxu0 0.0
    %601 = vmatpush1.msra.mxu0 0.0
    %602 = vmatprep.subr.mxu0 0.0
    %603 = vmatpush1.msra.mxu0 0.0
    %604 = vmatprep.subr.mxu0 0.0
    %605 = vmatpush1.msra.mxu0 0.0
    %606 = vmatprep.subr.mxu0 0.0
    %607 = vmatpush1.msra.mxu0 %v200
    %608 = vmatprep.subr.mxu0 0.0
    %609 = vmatpush1.msra.mxu0 %v199
    %610 = vmatprep.subr.mxu0 0.0
    %611 = vmatpush1.msra.mxu0 %v198
    %612 = vmatprep.subr.mxu0 0.0
    %613 = vmatpush1.msra.mxu0 %v197
    %614 = vmatprep.subr.mxu0 0.0
    %615 = vmatpush2.msra.mxu0 0.0
    %616 = vmatprep.subr.mxu0 0.0
    %617 = vmatpush2.msra.mxu0 0.0
    %618 = vmatprep.subr.mxu0 0.0
    %619 = vmatpush2.msra.mxu0 0.0
    %620 = vmatprep.subr.mxu0 0.0
    %621 = vmatpush2.msra.mxu0 0.0
    %622 = vmatprep.subr.mxu0 0.0
    %623 = vmatpush2.msra.mxu0 0.0
    %624 = vmatprep.subr.mxu0 0.0
    %625 = vmatpush2.msra.mxu0 0.0
    %626 = vmatprep.subr.mxu0 0.0
    %627 = vmatpush2.msra.mxu0 0.0
    %628 = vmatprep.subr.mxu0 0.0
    %629 = vmatpush2.msra.mxu0 0.0
    %630 = vmatprep.subr.mxu0 0.0
    %631 = vmatpush2.msra.mxu0 0.0
    %632 = vmatprep.subr.mxu0 0.0
    %633 = vmatpush2.msra.mxu0 0.0
    %634 = vmatprep.subr.mxu0 0.0
    %635 = vmatpush2.msra.mxu0 0.0
    %636 = vmatprep.subr.mxu0 0.0
    %637 = vmatpush2.msra.mxu0 0.0
    %638 = vmatprep.subr.mxu0 0.0
    %639 = vmatpush2.msra.mxu0 0.0
    %640 = vmatprep.subr.mxu0 0.0
    %641 = vmatpush2.msra.mxu0 0.0
    %642 = vmatprep.subr.mxu0 0.0
    %643 = vmatpush2.msra.mxu0 0.0
    %644 = vmatprep.subr.mxu0 0.0
    %645 = vmatpush2.msra.mxu0 0.0
    %646 = vmatprep.mubr.f32.mxu0 0.0
    %647 = vmatmul.mubr.f32.gmra.mxu0 %v571
    %v648 = vpop.f32.mrf.mxu0
    %v649 = vadd.f32 %v556, %v648
    %v650 = vpop.f32.mrf.mxu0
    %651 = vmatprep.mubr.f32.mxu0 0.0
    %652 = vmatmul.mubr.f32.gmra.mxu0 %v574
    %v653 = vpop.f32.mrf.mxu0
    %v654 = vadd.f32 %v560, %v653
    %v655 = vpop.f32.mrf.mxu0
    %656 = vmatprep.mubr.f32.mxu0 0.0
    %657 = vmatmul.mubr.f32.gmra.mxu0 %v577
    %v658 = vpop.f32.mrf.mxu0
    %v659 = vadd.f32 %v564, %v658
    %v660 = vpop.f32.mrf.mxu0
    %661 = vmatprep.mubr.f32.mxu0 0.0
    %662 = vmatmul.mubr.f32.gmra.mxu0 %v580
    %v663 = vpop.f32.mrf.mxu0
    %v664 = vadd.f32 %v568, %v663
    %v665 = vpop.f32.mrf.mxu0
    %666 = vdwg.mxu0
    %v667 = vmul.f32 %v649, 0.5
    %v668 = vmul.f32 %v654, 0.5
    %v669 = vmul.f32 %v659, 0.5
    %v670 = vmul.f32 %v664, 0.5
    %v671 = vtanh.pop %v667
    %v672 = vtanh.pop %v668
    %v673 = vtanh.pop %v669
    %v674 = vtanh.pop %v670
    %v675 = vmul.f32 %v671, 0.5
    %v676 = vmul.f32 %v672, 0.5
    %v677 = vmul.f32 %v673, 0.5
    %v678 = vmul.f32 %v674, 0.5
    %v679 = vadd.f32 %v675, 0.5
    %v680 = vadd.f32 %v676, 0.5
    %v681 = vadd.f32 %v677, 0.5
    %v682 = vadd.f32 %v678, 0.5
    %v683 = vsub.f32 %v388, %v550
    %v684 = vsub.f32 %v389, %v551
    %v685 = vsub.f32 %v390, %v552
    %v686 = vsub.f32 %v391, %v553
    %v687 = vmul.f32 %v679, %v683
    %v688 = vmul.f32 %v680, %v684
    %v689 = vmul.f32 %v681, %v685
    %v690 = vmul.f32 %v682, %v686
    %v691 = vsub.f32 1.0, %v679
    %v692 = vsub.f32 1.0, %v680
    %v693 = vsub.f32 1.0, %v681
    %v694 = vsub.f32 1.0, %v682
    %v695 = vmul.f32 %v691, %v197
    %v696 = vmul.f32 %v692, %v198
    %v697 = vmul.f32 %v693, %v199
    %v698 = vmul.f32 %v694, %v200
    %v700 = vsel %vm250, %v217, 0
    %v703 = vsel %vm250, %v218, 0
    %v706 = vsel %vm250, %v219, 0
    %v709 = vsel %vm250, %v220, 0
    %711 = vmatprep.subr.mxu0 0.0
    %712 = vmatpush1.msra.mxu0 0.0
    %713 = vmatprep.subr.mxu0 0.0
    %714 = vmatpush1.msra.mxu0 0.0
    %715 = vmatprep.subr.mxu0 0.0
    %716 = vmatpush1.msra.mxu0 0.0
    %717 = vmatprep.subr.mxu0 0.0
    %718 = vmatpush1.msra.mxu0 0.0
    %719 = vmatprep.subr.mxu0 0.0
    %720 = vmatpush1.msra.mxu0 0.0
    %721 = vmatprep.subr.mxu0 0.0
    %722 = vmatpush1.msra.mxu0 0.0
    %723 = vmatprep.subr.mxu0 0.0
    %724 = vmatpush1.msra.mxu0 0.0
    %725 = vmatprep.subr.mxu0 0.0
    %726 = vmatpush1.msra.mxu0 0.0
    %727 = vmatprep.subr.mxu0 0.0
    %728 = vmatpush1.msra.mxu0 0.0
    %729 = vmatprep.subr.mxu0 0.0
    %730 = vmatpush1.msra.mxu0 0.0
    %731 = vmatprep.subr.mxu0 0.0
    %732 = vmatpush1.msra.mxu0 0.0
    %733 = vmatprep.subr.mxu0 0.0
    %734 = vmatpush1.msra.mxu0 0.0
    %735 = vmatprep.subr.mxu0 0.0
    %736 = vmatpush1.msra.mxu0 %v698
    %737 = vmatprep.subr.mxu0 0.0
    %738 = vmatpush1.msra.mxu0 %v697
    %739 = vmatprep.subr.mxu0 0.0
    %740 = vmatpush1.msra.mxu0 %v696
    %741 = vmatprep.subr.mxu0 0.0
    %742 = vmatpush1.msra.mxu0 %v695
    %743 = vmatprep.subr.mxu0 0.0
    %744 = vmatpush2.msra.mxu0 0.0
    %745 = vmatprep.subr.mxu0 0.0
    %746 = vmatpush2.msra.mxu0 0.0
    %747 = vmatprep.subr.mxu0 0.0
    %748 = vmatpush2.msra.mxu0 0.0
    %749 = vmatprep.subr.mxu0 0.0
    %750 = vmatpush2.msra.mxu0 0.0
    %751 = vmatprep.subr.mxu0 0.0
    %752 = vmatpush2.msra.mxu0 0.0
    %753 = vmatprep.subr.mxu0 0.0
    %754 = vmatpush2.msra.mxu0 0.0
    %755 = vmatprep.subr.mxu0 0.0
    %756 = vmatpush2.msra.mxu0 0.0
    %757 = vmatprep.subr.mxu0 0.0
    %758 = vmatpush2.msra.mxu0 0.0
    %759 = vmatprep.subr.mxu0 0.0
    %760 = vmatpush2.msra.mxu0 0.0
    %761 = vmatprep.subr.mxu0 0.0
    %762 = vmatpush2.msra.mxu0 0.0
    %763 = vmatprep.subr.mxu0 0.0
    %764 = vmatpush2.msra.mxu0 0.0
    %765 = vmatprep.subr.mxu0 0.0
    %766 = vmatpush2.msra.mxu0 0.0
    %767 = vmatprep.subr.mxu0 0.0
    %768 = vmatpush2.msra.mxu0 0.0
    %769 = vmatprep.subr.mxu0 0.0
    %770 = vmatpush2.msra.mxu0 0.0
    %771 = vmatprep.subr.mxu0 0.0
    %772 = vmatpush2.msra.mxu0 0.0
    %773 = vmatprep.subr.mxu0 0.0
    %774 = vmatpush2.msra.mxu0 0.0
    %775 = vmatprep.mubr.f32.mxu0 0.0
    %776 = vmatmul.mubr.f32.gmra.mxu0 %v700
    %v777 = vpop.f32.mrf.mxu0
    %v778 = vadd.f32 0.0, %v777
    %v779 = vpop.f32.mrf.mxu0
    %780 = vmatprep.mubr.f32.mxu0 0.0
    %781 = vmatmul.mubr.f32.gmra.mxu0 %v703
    %v782 = vpop.f32.mrf.mxu0
    %v783 = vadd.f32 0.0, %v782
    %v784 = vpop.f32.mrf.mxu0
    %785 = vmatprep.mubr.f32.mxu0 0.0
    %786 = vmatmul.mubr.f32.gmra.mxu0 %v706
    %v787 = vpop.f32.mrf.mxu0
    %v788 = vadd.f32 0.0, %v787
    %v789 = vpop.f32.mrf.mxu0
    %790 = vmatprep.mubr.f32.mxu0 0.0
    %791 = vmatmul.mubr.f32.gmra.mxu0 %v709
    %v792 = vpop.f32.mrf.mxu0
    %v793 = vadd.f32 0.0, %v792
    %v794 = vpop.f32.mrf.mxu0
    %795 = vdwg.mxu0
    %v797 = vsel %vm250, %v213, 0
    %v800 = vsel %vm250, %v214, 0
    %v803 = vsel %vm250, %v215, 0
    %v806 = vsel %vm250, %v216, 0
    %808 = vmatprep.subr.mxu0 0.0
    %809 = vmatpush1.msra.mxu0 0.0
    %810 = vmatprep.subr.mxu0 0.0
    %811 = vmatpush1.msra.mxu0 0.0
    %812 = vmatprep.subr.mxu0 0.0
    %813 = vmatpush1.msra.mxu0 0.0
    %814 = vmatprep.subr.mxu0 0.0
    %815 = vmatpush1.msra.mxu0 0.0
    %816 = vmatprep.subr.mxu0 0.0
    %817 = vmatpush1.msra.mxu0 0.0
    %818 = vmatprep.subr.mxu0 0.0
    %819 = vmatpush1.msra.mxu0 0.0
    %820 = vmatprep.subr.mxu0 0.0
    %821 = vmatpush1.msra.mxu0 0.0
    %822 = vmatprep.subr.mxu0 0.0
    %823 = vmatpush1.msra.mxu0 0.0
    %824 = vmatprep.subr.mxu0 0.0
    %825 = vmatpush1.msra.mxu0 0.0
    %826 = vmatprep.subr.mxu0 0.0
    %827 = vmatpush1.msra.mxu0 0.0
    %828 = vmatprep.subr.mxu0 0.0
    %829 = vmatpush1.msra.mxu0 0.0
    %830 = vmatprep.subr.mxu0 0.0
    %831 = vmatpush1.msra.mxu0 0.0
    %832 = vmatprep.subr.mxu0 0.0
    %833 = vmatpush1.msra.mxu0 %v690
    %834 = vmatprep.subr.mxu0 0.0
    %835 = vmatpush1.msra.mxu0 %v689
    %836 = vmatprep.subr.mxu0 0.0
    %837 = vmatpush1.msra.mxu0 %v688
    %838 = vmatprep.subr.mxu0 0.0
    %839 = vmatpush1.msra.mxu0 %v687
    %840 = vmatprep.subr.mxu0 0.0
    %841 = vmatpush2.msra.mxu0 0.0
    %842 = vmatprep.subr.mxu0 0.0
    %843 = vmatpush2.msra.mxu0 0.0
    %844 = vmatprep.subr.mxu0 0.0
    %845 = vmatpush2.msra.mxu0 0.0
    %846 = vmatprep.subr.mxu0 0.0
    %847 = vmatpush2.msra.mxu0 0.0
    %848 = vmatprep.subr.mxu0 0.0
    %849 = vmatpush2.msra.mxu0 0.0
    %850 = vmatprep.subr.mxu0 0.0
    %851 = vmatpush2.msra.mxu0 0.0
    %852 = vmatprep.subr.mxu0 0.0
    %853 = vmatpush2.msra.mxu0 0.0
    %854 = vmatprep.subr.mxu0 0.0
    %855 = vmatpush2.msra.mxu0 0.0
    %856 = vmatprep.subr.mxu0 0.0
    %857 = vmatpush2.msra.mxu0 0.0
    %858 = vmatprep.subr.mxu0 0.0
    %859 = vmatpush2.msra.mxu0 0.0
    %860 = vmatprep.subr.mxu0 0.0
    %861 = vmatpush2.msra.mxu0 0.0
    %862 = vmatprep.subr.mxu0 0.0
    %863 = vmatpush2.msra.mxu0 0.0
    %864 = vmatprep.subr.mxu0 0.0
    %865 = vmatpush2.msra.mxu0 0.0
    %866 = vmatprep.subr.mxu0 0.0
    %867 = vmatpush2.msra.mxu0 0.0
    %868 = vmatprep.subr.mxu0 0.0
    %869 = vmatpush2.msra.mxu0 0.0
    %870 = vmatprep.subr.mxu0 0.0
    %871 = vmatpush2.msra.mxu0 0.0
    %872 = vmatprep.mubr.f32.mxu0 0.0
    %873 = vmatmul.mubr.f32.gmra.mxu0 %v797
    %v874 = vpop.f32.mrf.mxu0
    %v875 = vadd.f32 %v778, %v874
    %v876 = vpop.f32.mrf.mxu0
    %877 = vmatprep.mubr.f32.mxu0 0.0
    %878 = vmatmul.mubr.f32.gmra.mxu0 %v800
    %v879 = vpop.f32.mrf.mxu0
    %v880 = vadd.f32 %v783, %v879
    %v881 = vpop.f32.mrf.mxu0
    %882 = vmatprep.mubr.f32.mxu0 0.0
    %883 = vmatmul.mubr.f32.gmra.mxu0 %v803
    %v884 = vpop.f32.mrf.mxu0
    %v885 = vadd.f32 %v788, %v884
    %v886 = vpop.f32.mrf.mxu0
    %887 = vmatprep.mubr.f32.mxu0 0.0
    %888 = vmatmul.mubr.f32.gmra.mxu0 %v806
    %v889 = vpop.f32.mrf.mxu0
    %v890 = vadd.f32 %v793, %v889
    %v891 = vpop.f32.mrf.mxu0
    %892 = vdwg.mxu0
    %893 = vset.pattern.permute.xlu0 3
    %894 = vperm.xlu0 %893, %v221
    %v895 = vpop.permute.xlu0 %894
    %897 = vset.pattern.permute.xlu0 3
    %898 = vperm.xlu0 %897, %v222
    %v899 = vpop.permute.xlu0 %898
    %901 = vset.pattern.permute.xlu0 3
    %902 = vperm.xlu0 %901, %v223
    %v903 = vpop.permute.xlu0 %902
    %905 = vset.pattern.permute.xlu0 3
    %906 = vperm.xlu0 %905, %v224
    %v907 = vpop.permute.xlu0 %906
    %v909 = vadd.f32 %v875, %v895
    %v910 = vadd.f32 %v880, %v899
    %v911 = vadd.f32 %v885, %v903
    %v912 = vadd.f32 %v890, %v907
    %v913 = vadd.f32 %v197, %v909
    %v914 = vadd.f32 %v198, %v910
    %v915 = vadd.f32 %v199, %v911
    %v916 = vadd.f32 %v200, %v912
    %v917 = vadd.f32 %v913, %v914
    %v918 = vadd.f32 %v917, %v915
    %v919 = vadd.f32 %v918, %v916
    %v920 = vrot.slane %v919, 4
    %v921 = vadd.f32 %v919, %v920
    %v922 = vrot.slane %v921, 2
    %v923 = vadd.f32 %v921, %v922
    %v924 = vrot.slane %v923, 1
    %v925 = vadd.f32 %v923, %v924
    %v926 = vrcp.pop 32.0
    %v927 = vmul.f32 %v925, %v926
    %v928 = vsub.f32 %v913, %v927
    %v929 = vsub.f32 %v914, %v927
    %v930 = vsub.f32 %v915, %v927
    %v931 = vsub.f32 %v916, %v927
    %v932 = vmul.f32 %v928, %v928
    %v933 = vmul.f32 %v929, %v929
    %v934 = vmul.f32 %v930, %v930
    %v935 = vmul.f32 %v931, %v931
    %v936 = vadd.f32 %v932, %v933
    %v937 = vadd.f32 %v936, %v934
    %v938 = vadd.f32 %v937, %v935
    %v939 = vrot.slane %v938, 4
    %v940 = vadd.f32 %v938, %v939
    %v941 = vrot.slane %v940, 2
    %v942 = vadd.f32 %v940, %v941
    %v943 = vrot.slane %v942, 1
    %v944 = vadd.f32 %v942, %v943
    %v945 = vmul.f32 %v944, %v926
    %v946 = vadd.f32 %v945, 1e-05
    %v947 = vrsqrt.pop %v946
    %v948 = vmul.f32 %v928, %v947
    %v949 = vmul.f32 %v929, %v947
    %v950 = vmul.f32 %v930, %v947
    %v951 = vmul.f32 %v931, %v947
    %952 = vset.pattern.permute.xlu0 4
    %953 = vperm.xlu0 %952, %v221
    %v954 = vpop.permute.xlu0 %953
    %956 = vset.pattern.permute.xlu0 4
    %957 = vperm.xlu0 %956, %v222
    %v958 = vpop.permute.xlu0 %957
    %960 = vset.pattern.permute.xlu0 4
    %961 = vperm.xlu0 %960, %v223
    %v962 = vpop.permute.xlu0 %961
    %964 = vset.pattern.permute.xlu0 4
    %965 = vperm.xlu0 %964, %v224
    %v966 = vpop.permute.xlu0 %965
    %v968 = vmul.f32 %v948, %v954
    %v969 = vmul.f32 %v949, %v958
    %v970 = vmul.f32 %v950, %v962
    %v971 = vmul.f32 %v951, %v966
    %972 = vset.pattern.permute.xlu0 5
    %973 = vperm.xlu0 %972, %v221
    %v974 = vpop.permute.xlu0 %973
    %976 = vset.pattern.permute.xlu0 5
    %977 = vperm.xlu0 %976, %v222
    %v978 = vpop.permute.xlu0 %977
    %980 = vset.pattern.permute.xlu0 5
    %981 = vperm.xlu0 %980, %v223
    %v982 = vpop.permute.xlu0 %981
    %984 = vset.pattern.permute.xlu0 5
    %985 = vperm.xlu0 %984, %v224
    %v986 = vpop.permute.xlu0 %985
    %v988 = vadd.f32 %v968, %v974
    %v989 = vadd.f32 %v969, %v978
    %v990 = vadd.f32 %v970, %v982
    %v991 = vadd.f32 %v971, %v986
    %s992 = scalar_lea.vmem [#allocation2], 160
    %v993 = vld [vmem:[%s992] sm:$0xff]
    %v994 = vld [vmem:[%s992 + $0x8] sm:$0xff]
    %v995 = vld [vmem:[%s992 + $0x10] sm:$0xff]
    %v996 = vld [vmem:[%s992 + $0x18] sm:$0xff]
    %v997 = vld [vmem:[%s992 + $0x20] sm:$0xff]
    %v998 = vld [vmem:[%s992 + $0x28] sm:$0xff]
    %v999 = vld [vmem:[%s992 + $0x30] sm:$0xff]
    %v1000 = vld [vmem:[%s992 + $0x38] sm:$0xff]
    %v1001 = vld [vmem:[%s992 + $0x40] sm:$0xff]
    %v1002 = vld [vmem:[%s992 + $0x48] sm:$0xff]
    %v1003 = vld [vmem:[%s992 + $0x50] sm:$0xff]
    %v1004 = vld [vmem:[%s992 + $0x58] sm:$0xff]
    %v1005 = vld [vmem:[%s992 + $0x60] sm:$0xff]
    %v1006 = vld [vmem:[%s992 + $0x68] sm:$0xff]
    %v1007 = vld [vmem:[%s992 + $0x70] sm:$0xff]
    %v1008 = vld [vmem:[%s992 + $0x78] sm:$0xff]
    %v1009 = vld [vmem:[%s992 + $0x80] sm:$0xff]
    %v1010 = vld [vmem:[%s992 + $0x88] sm:$0xff]
    %v1011 = vld [vmem:[%s992 + $0x90] sm:$0xff]
    %v1012 = vld [vmem:[%s992 + $0x98] sm:$0xff]
    %s1013 = scalar_lea.vmem %s4, 32
    %v1014 = vld [vmem:[%s1013] sm:$0xff]
    %v1015 = vld [vmem:[%s1013 + $0x8] sm:$0xff]
    %v1016 = vld [vmem:[%s1013 + $0x10] sm:$0xff]
    %v1017 = vld [vmem:[%s1013 + $0x18] sm:$0xff]
    %v1018 = vmax.f32 %v988, %v989
    %v1019 = vmax.f32 %v990, %v991
    %v1020 = vmax.f32 %v1018, %v1019
    %v1021 = vrot.slane %v1020, 4
    %v1022 = vmax.f32 %v1020, %v1021
    %v1023 = vrot.slane %v1022, 2
    %v1024 = vmax.f32 %v1022, %v1023
    %v1025 = vrot.slane %v1024, 1
    %v1026 = vmax.f32 %v1024, %v1025
    %v1027 = vsub.f32 %v988, %v1026
    %v1028 = vsub.f32 %v989, %v1026
    %v1029 = vsub.f32 %v990, %v1026
    %v1030 = vsub.f32 %v991, %v1026
    %v1031 = vmul.f32 %v1027, 5.0
    %v1032 = vmul.f32 %v1028, 5.0
    %v1033 = vmul.f32 %v1029, 5.0
    %v1034 = vmul.f32 %v1030, 5.0
    %v1035 = vmul.f32 %v1031, 1.442695
    %v1036 = vpow.pop %v1035
    %v1037 = vmul.f32 %v1032, 1.442695
    %v1038 = vpow.pop %v1037
    %v1039 = vmul.f32 %v1033, 1.442695
    %v1040 = vpow.pop %v1039
    %v1041 = vmul.f32 %v1034, 1.442695
    %v1042 = vpow.pop %v1041
    %v1044 = vsel %vm250, %v993, 0
    %v1047 = vsel %vm250, %v994, 0
    %v1050 = vsel %vm250, %v995, 0
    %v1053 = vsel %vm250, %v996, 0
    %1055 = vmatprep.subr.mxu0 0.0
    %1056 = vmatpush1.msra.mxu0 0.0
    %1057 = vmatprep.subr.mxu0 0.0
    %1058 = vmatpush1.msra.mxu0 0.0
    %1059 = vmatprep.subr.mxu0 0.0
    %1060 = vmatpush1.msra.mxu0 0.0
    %1061 = vmatprep.subr.mxu0 0.0
    %1062 = vmatpush1.msra.mxu0 0.0
    %1063 = vmatprep.subr.mxu0 0.0
    %1064 = vmatpush1.msra.mxu0 0.0
    %1065 = vmatprep.subr.mxu0 0.0
    %1066 = vmatpush1.msra.mxu0 0.0
    %1067 = vmatprep.subr.mxu0 0.0
    %1068 = vmatpush1.msra.mxu0 0.0
    %1069 = vmatprep.subr.mxu0 0.0
    %1070 = vmatpush1.msra.mxu0 0.0
    %1071 = vmatprep.subr.mxu0 0.0
    %1072 = vmatpush1.msra.mxu0 0.0
    %1073 = vmatprep.subr.mxu0 0.0
    %1074 = vmatpush1.msra.mxu0 0.0
    %1075 = vmatprep.subr.mxu0 0.0
    %1076 = vmatpush1.msra.mxu0 0.0
    %1077 = vmatprep.subr.mxu0 0.0
    %1078 = vmatpush1.msra.mxu0 0.0
    %1079 = vmatprep.subr.mxu0 0.0
    %1080 = vmatpush1.msra.mxu0 %v1042
    %1081 = vmatprep.subr.mxu0 0.0
    %1082 = vmatpush1.msra.mxu0 %v1040
    %1083 = vmatprep.subr.mxu0 0.0
    %1084 = vmatpush1.msra.mxu0 %v1038
    %1085 = vmatprep.subr.mxu0 0.0
    %1086 = vmatpush1.msra.mxu0 %v1036
    %1087 = vmatprep.subr.mxu0 0.0
    %1088 = vmatpush2.msra.mxu0 0.0
    %1089 = vmatprep.subr.mxu0 0.0
    %1090 = vmatpush2.msra.mxu0 0.0
    %1091 = vmatprep.subr.mxu0 0.0
    %1092 = vmatpush2.msra.mxu0 0.0
    %1093 = vmatprep.subr.mxu0 0.0
    %1094 = vmatpush2.msra.mxu0 0.0
    %1095 = vmatprep.subr.mxu0 0.0
    %1096 = vmatpush2.msra.mxu0 0.0
    %1097 = vmatprep.subr.mxu0 0.0
    %1098 = vmatpush2.msra.mxu0 0.0
    %1099 = vmatprep.subr.mxu0 0.0
    %1100 = vmatpush2.msra.mxu0 0.0
    %1101 = vmatprep.subr.mxu0 0.0
    %1102 = vmatpush2.msra.mxu0 0.0
    %1103 = vmatprep.subr.mxu0 0.0
    %1104 = vmatpush2.msra.mxu0 0.0
    %1105 = vmatprep.subr.mxu0 0.0
    %1106 = vmatpush2.msra.mxu0 0.0
    %1107 = vmatprep.subr.mxu0 0.0
    %1108 = vmatpush2.msra.mxu0 0.0
    %1109 = vmatprep.subr.mxu0 0.0
    %1110 = vmatpush2.msra.mxu0 0.0
    %1111 = vmatprep.subr.mxu0 0.0
    %1112 = vmatpush2.msra.mxu0 0.0
    %1113 = vmatprep.subr.mxu0 0.0
    %1114 = vmatpush2.msra.mxu0 0.0
    %1115 = vmatprep.subr.mxu0 0.0
    %1116 = vmatpush2.msra.mxu0 0.0
    %1117 = vmatprep.subr.mxu0 0.0
    %1118 = vmatpush2.msra.mxu0 0.0
    %1119 = vmatprep.mubr.f32.mxu0 0.0
    %1120 = vmatmul.mubr.f32.gmra.mxu0 %v1044
    %v1121 = vpop.f32.mrf.mxu0
    %v1122 = vadd.f32 0.0, %v1121
    %v1123 = vpop.f32.mrf.mxu0
    %1124 = vmatprep.mubr.f32.mxu0 0.0
    %1125 = vmatmul.mubr.f32.gmra.mxu0 %v1047
    %v1126 = vpop.f32.mrf.mxu0
    %v1127 = vadd.f32 0.0, %v1126
    %v1128 = vpop.f32.mrf.mxu0
    %1129 = vmatprep.mubr.f32.mxu0 0.0
    %1130 = vmatmul.mubr.f32.gmra.mxu0 %v1050
    %v1131 = vpop.f32.mrf.mxu0
    %v1132 = vadd.f32 0.0, %v1131
    %v1133 = vpop.f32.mrf.mxu0
    %1134 = vmatprep.mubr.f32.mxu0 0.0
    %1135 = vmatmul.mubr.f32.gmra.mxu0 %v1053
    %v1136 = vpop.f32.mrf.mxu0
    %v1137 = vadd.f32 0.0, %v1136
    %v1138 = vpop.f32.mrf.mxu0
    %1139 = vdwg.mxu0
    %1141 = vset.pattern.permute.xlu0 0
    %1142 = vperm.xlu0 %1141, %v1014
    %v1143 = vpop.permute.xlu0 %1142
    %1146 = vset.pattern.permute.xlu0 0
    %1147 = vperm.xlu0 %1146, %v1015
    %v1148 = vpop.permute.xlu0 %1147
    %1151 = vset.pattern.permute.xlu0 0
    %1152 = vperm.xlu0 %1151, %v1016
    %v1153 = vpop.permute.xlu0 %1152
    %1156 = vset.pattern.permute.xlu0 0
    %1157 = vperm.xlu0 %1156, %v1017
    %v1158 = vpop.permute.xlu0 %1157
    %v1160 = vadd.f32 %v1026, %v1143
    %v1161 = vadd.f32 %v1026, %v1148
    %v1162 = vadd.f32 %v1026, %v1153
    %v1163 = vadd.f32 %v1026, %v1158
    %v1164 = vmax.f32 %v1122, 1e-30
    %v1165 = vmax.f32 %v1127, 1e-30
    %v1166 = vmax.f32 %v1132, 1e-30
    %v1167 = vmax.f32 %v1137, 1e-30
    %v1168 = vlog2.pop %v1164
    %v1169 = vmul.f32 %v1168, 0.6931472
    %v1170 = vlog2.pop %v1165
    %v1171 = vmul.f32 %v1170, 0.6931472
    %v1172 = vlog2.pop %v1166
    %v1173 = vmul.f32 %v1172, 0.6931472
    %v1174 = vlog2.pop %v1167
    %v1175 = vmul.f32 %v1174, 0.6931472
    %v1176 = vmul.f32 %v1169, 0.2
    %v1177 = vmul.f32 %v1171, 0.2
    %v1178 = vmul.f32 %v1173, 0.2
    %v1179 = vmul.f32 %v1175, 0.2
    %v1180 = vadd.f32 %v1160, %v1176
    %v1181 = vadd.f32 %v1161, %v1177
    %v1182 = vadd.f32 %v1162, %v1178
    %v1183 = vadd.f32 %v1163, %v1179
    %v1184 = vmin.f32 %v988, %v989
    %v1185 = vmin.f32 %v990, %v991
    %v1186 = vmin.f32 %v1184, %v1185
    %v1187 = vrot.slane %v1186, 4
    %v1188 = vmin.f32 %v1186, %v1187
    %v1189 = vrot.slane %v1188, 2
    %v1190 = vmin.f32 %v1188, %v1189
    %v1191 = vrot.slane %v1190, 1
    %v1192 = vmin.f32 %v1190, %v1191
    %v1193 = vsub.f32 %v1192, %v988
    %v1194 = vsub.f32 %v1192, %v989
    %v1195 = vsub.f32 %v1192, %v990
    %v1196 = vsub.f32 %v1192, %v991
    %v1197 = vmul.f32 %v1193, 5.0
    %v1198 = vmul.f32 %v1194, 5.0
    %v1199 = vmul.f32 %v1195, 5.0
    %v1200 = vmul.f32 %v1196, 5.0
    %v1201 = vmul.f32 %v1197, 1.442695
    %v1202 = vpow.pop %v1201
    %v1203 = vmul.f32 %v1198, 1.442695
    %v1204 = vpow.pop %v1203
    %v1205 = vmul.f32 %v1199, 1.442695
    %v1206 = vpow.pop %v1205
    %v1207 = vmul.f32 %v1200, 1.442695
    %v1208 = vpow.pop %v1207
    %v1210 = vsel %vm250, %v997, 0
    %v1213 = vsel %vm250, %v998, 0
    %v1216 = vsel %vm250, %v999, 0
    %v1219 = vsel %vm250, %v1000, 0
    %1221 = vmatprep.subr.mxu0 0.0
    %1222 = vmatpush1.msra.mxu0 0.0
    %1223 = vmatprep.subr.mxu0 0.0
    %1224 = vmatpush1.msra.mxu0 0.0
    %1225 = vmatprep.subr.mxu0 0.0
    %1226 = vmatpush1.msra.mxu0 0.0
    %1227 = vmatprep.subr.mxu0 0.0
    %1228 = vmatpush1.msra.mxu0 0.0
    %1229 = vmatprep.subr.mxu0 0.0
    %1230 = vmatpush1.msra.mxu0 0.0
    %1231 = vmatprep.subr.mxu0 0.0
    %1232 = vmatpush1.msra.mxu0 0.0
    %1233 = vmatprep.subr.mxu0 0.0
    %1234 = vmatpush1.msra.mxu0 0.0
    %1235 = vmatprep.subr.mxu0 0.0
    %1236 = vmatpush1.msra.mxu0 0.0
    %1237 = vmatprep.subr.mxu0 0.0
    %1238 = vmatpush1.msra.mxu0 0.0
    %1239 = vmatprep.subr.mxu0 0.0
    %1240 = vmatpush1.msra.mxu0 0.0
    %1241 = vmatprep.subr.mxu0 0.0
    %1242 = vmatpush1.msra.mxu0 0.0
    %1243 = vmatprep.subr.mxu0 0.0
    %1244 = vmatpush1.msra.mxu0 0.0
    %1245 = vmatprep.subr.mxu0 0.0
    %1246 = vmatpush1.msra.mxu0 %v1208
    %1247 = vmatprep.subr.mxu0 0.0
    %1248 = vmatpush1.msra.mxu0 %v1206
    %1249 = vmatprep.subr.mxu0 0.0
    %1250 = vmatpush1.msra.mxu0 %v1204
    %1251 = vmatprep.subr.mxu0 0.0
    %1252 = vmatpush1.msra.mxu0 %v1202
    %1253 = vmatprep.subr.mxu0 0.0
    %1254 = vmatpush2.msra.mxu0 0.0
    %1255 = vmatprep.subr.mxu0 0.0
    %1256 = vmatpush2.msra.mxu0 0.0
    %1257 = vmatprep.subr.mxu0 0.0
    %1258 = vmatpush2.msra.mxu0 0.0
    %1259 = vmatprep.subr.mxu0 0.0
    %1260 = vmatpush2.msra.mxu0 0.0
    %1261 = vmatprep.subr.mxu0 0.0
    %1262 = vmatpush2.msra.mxu0 0.0
    %1263 = vmatprep.subr.mxu0 0.0
    %1264 = vmatpush2.msra.mxu0 0.0
    %1265 = vmatprep.subr.mxu0 0.0
    %1266 = vmatpush2.msra.mxu0 0.0
    %1267 = vmatprep.subr.mxu0 0.0
    %1268 = vmatpush2.msra.mxu0 0.0
    %1269 = vmatprep.subr.mxu0 0.0
    %1270 = vmatpush2.msra.mxu0 0.0
    %1271 = vmatprep.subr.mxu0 0.0
    %1272 = vmatpush2.msra.mxu0 0.0
    %1273 = vmatprep.subr.mxu0 0.0
    %1274 = vmatpush2.msra.mxu0 0.0
    %1275 = vmatprep.subr.mxu0 0.0
    %1276 = vmatpush2.msra.mxu0 0.0
    %1277 = vmatprep.subr.mxu0 0.0
    %1278 = vmatpush2.msra.mxu0 0.0
    %1279 = vmatprep.subr.mxu0 0.0
    %1280 = vmatpush2.msra.mxu0 0.0
    %1281 = vmatprep.subr.mxu0 0.0
    %1282 = vmatpush2.msra.mxu0 0.0
    %1283 = vmatprep.subr.mxu0 0.0
    %1284 = vmatpush2.msra.mxu0 0.0
    %1285 = vmatprep.mubr.f32.mxu0 0.0
    %1286 = vmatmul.mubr.f32.gmra.mxu0 %v1210
    %v1287 = vpop.f32.mrf.mxu0
    %v1288 = vadd.f32 0.0, %v1287
    %v1289 = vpop.f32.mrf.mxu0
    %1290 = vmatprep.mubr.f32.mxu0 0.0
    %1291 = vmatmul.mubr.f32.gmra.mxu0 %v1213
    %v1292 = vpop.f32.mrf.mxu0
    %v1293 = vadd.f32 0.0, %v1292
    %v1294 = vpop.f32.mrf.mxu0
    %1295 = vmatprep.mubr.f32.mxu0 0.0
    %1296 = vmatmul.mubr.f32.gmra.mxu0 %v1216
    %v1297 = vpop.f32.mrf.mxu0
    %v1298 = vadd.f32 0.0, %v1297
    %v1299 = vpop.f32.mrf.mxu0
    %1300 = vmatprep.mubr.f32.mxu0 0.0
    %1301 = vmatmul.mubr.f32.gmra.mxu0 %v1219
    %v1302 = vpop.f32.mrf.mxu0
    %v1303 = vadd.f32 0.0, %v1302
    %v1304 = vpop.f32.mrf.mxu0
    %1305 = vdwg.mxu0
    %1306 = vset.pattern.permute.xlu0 1
    %1307 = vperm.xlu0 %1306, %v1014
    %v1308 = vpop.permute.xlu0 %1307
    %1310 = vset.pattern.permute.xlu0 1
    %1311 = vperm.xlu0 %1310, %v1015
    %v1312 = vpop.permute.xlu0 %1311
    %1314 = vset.pattern.permute.xlu0 1
    %1315 = vperm.xlu0 %1314, %v1016
    %v1316 = vpop.permute.xlu0 %1315
    %1318 = vset.pattern.permute.xlu0 1
    %1319 = vperm.xlu0 %1318, %v1017
    %v1320 = vpop.permute.xlu0 %1319
    %v1322 = vadd.f32 %v1192, %v1308
    %v1323 = vadd.f32 %v1192, %v1312
    %v1324 = vadd.f32 %v1192, %v1316
    %v1325 = vadd.f32 %v1192, %v1320
    %v1326 = vmax.f32 %v1288, 1e-30
    %v1327 = vmax.f32 %v1293, 1e-30
    %v1328 = vmax.f32 %v1298, 1e-30
    %v1329 = vmax.f32 %v1303, 1e-30
    %v1330 = vlog2.pop %v1326
    %v1331 = vmul.f32 %v1330, 0.6931472
    %v1332 = vlog2.pop %v1327
    %v1333 = vmul.f32 %v1332, 0.6931472
    %v1334 = vlog2.pop %v1328
    %v1335 = vmul.f32 %v1334, 0.6931472
    %v1336 = vlog2.pop %v1329
    %v1337 = vmul.f32 %v1336, 0.6931472
    %v1338 = vmul.f32 %v1331, 0.2
    %v1339 = vmul.f32 %v1333, 0.2
    %v1340 = vmul.f32 %v1335, 0.2
    %v1341 = vmul.f32 %v1337, 0.2
    %v1342 = vsub.f32 %v1322, %v1338
    %v1343 = vsub.f32 %v1323, %v1339
    %v1344 = vsub.f32 %v1324, %v1340
    %v1345 = vsub.f32 %v1325, %v1341
    %1346 = vset.pattern.permute.xlu0 2
    %1347 = vperm.xlu0 %1346, %v1014
    %v1348 = vpop.permute.xlu0 %1347
    %1350 = vset.pattern.permute.xlu0 2
    %1351 = vperm.xlu0 %1350, %v1015
    %v1352 = vpop.permute.xlu0 %1351
    %1354 = vset.pattern.permute.xlu0 2
    %1355 = vperm.xlu0 %1354, %v1016
    %v1356 = vpop.permute.xlu0 %1355
    %1358 = vset.pattern.permute.xlu0 2
    %1359 = vperm.xlu0 %1358, %v1017
    %v1360 = vpop.permute.xlu0 %1359
    %v1363 = vsel %vm250, %v1001, 0
    %v1366 = vsel %vm250, %v1002, 0
    %v1369 = vsel %vm250, %v1003, 0
    %v1372 = vsel %vm250, %v1004, 0
    %1374 = vmatprep.subr.mxu0 0.0
    %1375 = vmatpush1.msra.mxu0 0.0
    %1376 = vmatprep.subr.mxu0 0.0
    %1377 = vmatpush1.msra.mxu0 0.0
    %1378 = vmatprep.subr.mxu0 0.0
    %1379 = vmatpush1.msra.mxu0 0.0
    %1380 = vmatprep.subr.mxu0 0.0
    %1381 = vmatpush1.msra.mxu0 0.0
    %1382 = vmatprep.subr.mxu0 0.0
    %1383 = vmatpush1.msra.mxu0 0.0
    %1384 = vmatprep.subr.mxu0 0.0
    %1385 = vmatpush1.msra.mxu0 0.0
    %1386 = vmatprep.subr.mxu0 0.0
    %1387 = vmatpush1.msra.mxu0 0.0
    %1388 = vmatprep.subr.mxu0 0.0
    %1389 = vmatpush1.msra.mxu0 0.0
    %1390 = vmatprep.subr.mxu0 0.0
    %1391 = vmatpush1.msra.mxu0 0.0
    %1392 = vmatprep.subr.mxu0 0.0
    %1393 = vmatpush1.msra.mxu0 0.0
    %1394 = vmatprep.subr.mxu0 0.0
    %1395 = vmatpush1.msra.mxu0 0.0
    %1396 = vmatprep.subr.mxu0 0.0
    %1397 = vmatpush1.msra.mxu0 0.0
    %1398 = vmatprep.subr.mxu0 0.0
    %1399 = vmatpush1.msra.mxu0 %v991
    %1400 = vmatprep.subr.mxu0 0.0
    %1401 = vmatpush1.msra.mxu0 %v990
    %1402 = vmatprep.subr.mxu0 0.0
    %1403 = vmatpush1.msra.mxu0 %v989
    %1404 = vmatprep.subr.mxu0 0.0
    %1405 = vmatpush1.msra.mxu0 %v988
    %1406 = vmatprep.subr.mxu0 0.0
    %1407 = vmatpush2.msra.mxu0 0.0
    %1408 = vmatprep.subr.mxu0 0.0
    %1409 = vmatpush2.msra.mxu0 0.0
    %1410 = vmatprep.subr.mxu0 0.0
    %1411 = vmatpush2.msra.mxu0 0.0
    %1412 = vmatprep.subr.mxu0 0.0
    %1413 = vmatpush2.msra.mxu0 0.0
    %1414 = vmatprep.subr.mxu0 0.0
    %1415 = vmatpush2.msra.mxu0 0.0
    %1416 = vmatprep.subr.mxu0 0.0
    %1417 = vmatpush2.msra.mxu0 0.0
    %1418 = vmatprep.subr.mxu0 0.0
    %1419 = vmatpush2.msra.mxu0 0.0
    %1420 = vmatprep.subr.mxu0 0.0
    %1421 = vmatpush2.msra.mxu0 0.0
    %1422 = vmatprep.subr.mxu0 0.0
    %1423 = vmatpush2.msra.mxu0 0.0
    %1424 = vmatprep.subr.mxu0 0.0
    %1425 = vmatpush2.msra.mxu0 0.0
    %1426 = vmatprep.subr.mxu0 0.0
    %1427 = vmatpush2.msra.mxu0 0.0
    %1428 = vmatprep.subr.mxu0 0.0
    %1429 = vmatpush2.msra.mxu0 0.0
    %1430 = vmatprep.subr.mxu0 0.0
    %1431 = vmatpush2.msra.mxu0 0.0
    %1432 = vmatprep.subr.mxu0 0.0
    %1433 = vmatpush2.msra.mxu0 0.0
    %1434 = vmatprep.subr.mxu0 0.0
    %1435 = vmatpush2.msra.mxu0 0.0
    %1436 = vmatprep.subr.mxu0 0.0
    %1437 = vmatpush2.msra.mxu0 0.0
    %1438 = vmatprep.mubr.f32.mxu0 0.0
    %1439 = vmatmul.mubr.f32.gmra.mxu0 %v1363
    %v1440 = vpop.f32.mrf.mxu0
    %v1441 = vadd.f32 %v1348, %v1440
    %v1442 = vpop.f32.mrf.mxu0
    %1443 = vmatprep.mubr.f32.mxu0 0.0
    %1444 = vmatmul.mubr.f32.gmra.mxu0 %v1366
    %v1445 = vpop.f32.mrf.mxu0
    %v1446 = vadd.f32 %v1352, %v1445
    %v1447 = vpop.f32.mrf.mxu0
    %1448 = vmatprep.mubr.f32.mxu0 0.0
    %1449 = vmatmul.mubr.f32.gmra.mxu0 %v1369
    %v1450 = vpop.f32.mrf.mxu0
    %v1451 = vadd.f32 %v1356, %v1450
    %v1452 = vpop.f32.mrf.mxu0
    %1453 = vmatprep.mubr.f32.mxu0 0.0
    %1454 = vmatmul.mubr.f32.gmra.mxu0 %v1372
    %v1455 = vpop.f32.mrf.mxu0
    %v1456 = vadd.f32 %v1360, %v1455
    %v1457 = vpop.f32.mrf.mxu0
    %1458 = vdwg.mxu0
    %v1459 = vmul.f32 %v1441, 0.5
    %v1460 = vmul.f32 %v1446, 0.5
    %v1461 = vmul.f32 %v1451, 0.5
    %v1462 = vmul.f32 %v1456, 0.5
    %v1463 = vtanh.pop %v1459
    %v1464 = vtanh.pop %v1460
    %v1465 = vtanh.pop %v1461
    %v1466 = vtanh.pop %v1462
    %v1467 = vmul.f32 %v1463, 0.5
    %v1468 = vmul.f32 %v1464, 0.5
    %v1469 = vmul.f32 %v1465, 0.5
    %v1470 = vmul.f32 %v1466, 0.5
    %v1471 = vadd.f32 %v1467, 0.5
    %v1472 = vadd.f32 %v1468, 0.5
    %v1473 = vadd.f32 %v1469, 0.5
    %v1474 = vadd.f32 %v1470, 0.5
    %v1475 = vsub.f32 %v1180, %v1342
    %v1476 = vsub.f32 %v1181, %v1343
    %v1477 = vsub.f32 %v1182, %v1344
    %v1478 = vsub.f32 %v1183, %v1345
    %v1479 = vmul.f32 %v1471, %v1475
    %v1480 = vmul.f32 %v1472, %v1476
    %v1481 = vmul.f32 %v1473, %v1477
    %v1482 = vmul.f32 %v1474, %v1478
    %v1483 = vsub.f32 1.0, %v1471
    %v1484 = vsub.f32 1.0, %v1472
    %v1485 = vsub.f32 1.0, %v1473
    %v1486 = vsub.f32 1.0, %v1474
    %v1487 = vmul.f32 %v1483, %v988
    %v1488 = vmul.f32 %v1484, %v989
    %v1489 = vmul.f32 %v1485, %v990
    %v1490 = vmul.f32 %v1486, %v991
    %v1492 = vsel %vm250, %v1009, 0
    %v1495 = vsel %vm250, %v1010, 0
    %v1498 = vsel %vm250, %v1011, 0
    %v1501 = vsel %vm250, %v1012, 0
    %1503 = vmatprep.subr.mxu0 0.0
    %1504 = vmatpush1.msra.mxu0 0.0
    %1505 = vmatprep.subr.mxu0 0.0
    %1506 = vmatpush1.msra.mxu0 0.0
    %1507 = vmatprep.subr.mxu0 0.0
    %1508 = vmatpush1.msra.mxu0 0.0
    %1509 = vmatprep.subr.mxu0 0.0
    %1510 = vmatpush1.msra.mxu0 0.0
    %1511 = vmatprep.subr.mxu0 0.0
    %1512 = vmatpush1.msra.mxu0 0.0
    %1513 = vmatprep.subr.mxu0 0.0
    %1514 = vmatpush1.msra.mxu0 0.0
    %1515 = vmatprep.subr.mxu0 0.0
    %1516 = vmatpush1.msra.mxu0 0.0
    %1517 = vmatprep.subr.mxu0 0.0
    %1518 = vmatpush1.msra.mxu0 0.0
    %1519 = vmatprep.subr.mxu0 0.0
    %1520 = vmatpush1.msra.mxu0 0.0
    %1521 = vmatprep.subr.mxu0 0.0
    %1522 = vmatpush1.msra.mxu0 0.0
    %1523 = vmatprep.subr.mxu0 0.0
    %1524 = vmatpush1.msra.mxu0 0.0
    %1525 = vmatprep.subr.mxu0 0.0
    %1526 = vmatpush1.msra.mxu0 0.0
    %1527 = vmatprep.subr.mxu0 0.0
    %1528 = vmatpush1.msra.mxu0 %v1490
    %1529 = vmatprep.subr.mxu0 0.0
    %1530 = vmatpush1.msra.mxu0 %v1489
    %1531 = vmatprep.subr.mxu0 0.0
    %1532 = vmatpush1.msra.mxu0 %v1488
    %1533 = vmatprep.subr.mxu0 0.0
    %1534 = vmatpush1.msra.mxu0 %v1487
    %1535 = vmatprep.subr.mxu0 0.0
    %1536 = vmatpush2.msra.mxu0 0.0
    %1537 = vmatprep.subr.mxu0 0.0
    %1538 = vmatpush2.msra.mxu0 0.0
    %1539 = vmatprep.subr.mxu0 0.0
    %1540 = vmatpush2.msra.mxu0 0.0
    %1541 = vmatprep.subr.mxu0 0.0
    %1542 = vmatpush2.msra.mxu0 0.0
    %1543 = vmatprep.subr.mxu0 0.0
    %1544 = vmatpush2.msra.mxu0 0.0
    %1545 = vmatprep.subr.mxu0 0.0
    %1546 = vmatpush2.msra.mxu0 0.0
    %1547 = vmatprep.subr.mxu0 0.0
    %1548 = vmatpush2.msra.mxu0 0.0
    %1549 = vmatprep.subr.mxu0 0.0
    %1550 = vmatpush2.msra.mxu0 0.0
    %1551 = vmatprep.subr.mxu0 0.0
    %1552 = vmatpush2.msra.mxu0 0.0
    %1553 = vmatprep.subr.mxu0 0.0
    %1554 = vmatpush2.msra.mxu0 0.0
    %1555 = vmatprep.subr.mxu0 0.0
    %1556 = vmatpush2.msra.mxu0 0.0
    %1557 = vmatprep.subr.mxu0 0.0
    %1558 = vmatpush2.msra.mxu0 0.0
    %1559 = vmatprep.subr.mxu0 0.0
    %1560 = vmatpush2.msra.mxu0 0.0
    %1561 = vmatprep.subr.mxu0 0.0
    %1562 = vmatpush2.msra.mxu0 0.0
    %1563 = vmatprep.subr.mxu0 0.0
    %1564 = vmatpush2.msra.mxu0 0.0
    %1565 = vmatprep.subr.mxu0 0.0
    %1566 = vmatpush2.msra.mxu0 0.0
    %1567 = vmatprep.mubr.f32.mxu0 0.0
    %1568 = vmatmul.mubr.f32.gmra.mxu0 %v1492
    %v1569 = vpop.f32.mrf.mxu0
    %v1570 = vadd.f32 0.0, %v1569
    %v1571 = vpop.f32.mrf.mxu0
    %1572 = vmatprep.mubr.f32.mxu0 0.0
    %1573 = vmatmul.mubr.f32.gmra.mxu0 %v1495
    %v1574 = vpop.f32.mrf.mxu0
    %v1575 = vadd.f32 0.0, %v1574
    %v1576 = vpop.f32.mrf.mxu0
    %1577 = vmatprep.mubr.f32.mxu0 0.0
    %1578 = vmatmul.mubr.f32.gmra.mxu0 %v1498
    %v1579 = vpop.f32.mrf.mxu0
    %v1580 = vadd.f32 0.0, %v1579
    %v1581 = vpop.f32.mrf.mxu0
    %1582 = vmatprep.mubr.f32.mxu0 0.0
    %1583 = vmatmul.mubr.f32.gmra.mxu0 %v1501
    %v1584 = vpop.f32.mrf.mxu0
    %v1585 = vadd.f32 0.0, %v1584
    %v1586 = vpop.f32.mrf.mxu0
    %1587 = vdwg.mxu0
    %v1589 = vsel %vm250, %v1005, 0
    %v1592 = vsel %vm250, %v1006, 0
    %v1595 = vsel %vm250, %v1007, 0
    %v1598 = vsel %vm250, %v1008, 0
    %1600 = vmatprep.subr.mxu0 0.0
    %1601 = vmatpush1.msra.mxu0 0.0
    %1602 = vmatprep.subr.mxu0 0.0
    %1603 = vmatpush1.msra.mxu0 0.0
    %1604 = vmatprep.subr.mxu0 0.0
    %1605 = vmatpush1.msra.mxu0 0.0
    %1606 = vmatprep.subr.mxu0 0.0
    %1607 = vmatpush1.msra.mxu0 0.0
    %1608 = vmatprep.subr.mxu0 0.0
    %1609 = vmatpush1.msra.mxu0 0.0
    %1610 = vmatprep.subr.mxu0 0.0
    %1611 = vmatpush1.msra.mxu0 0.0
    %1612 = vmatprep.subr.mxu0 0.0
    %1613 = vmatpush1.msra.mxu0 0.0
    %1614 = vmatprep.subr.mxu0 0.0
    %1615 = vmatpush1.msra.mxu0 0.0
    %1616 = vmatprep.subr.mxu0 0.0
    %1617 = vmatpush1.msra.mxu0 0.0
    %1618 = vmatprep.subr.mxu0 0.0
    %1619 = vmatpush1.msra.mxu0 0.0
    %1620 = vmatprep.subr.mxu0 0.0
    %1621 = vmatpush1.msra.mxu0 0.0
    %1622 = vmatprep.subr.mxu0 0.0
    %1623 = vmatpush1.msra.mxu0 0.0
    %1624 = vmatprep.subr.mxu0 0.0
    %1625 = vmatpush1.msra.mxu0 %v1482
    %1626 = vmatprep.subr.mxu0 0.0
    %1627 = vmatpush1.msra.mxu0 %v1481
    %1628 = vmatprep.subr.mxu0 0.0
    %1629 = vmatpush1.msra.mxu0 %v1480
    %1630 = vmatprep.subr.mxu0 0.0
    %1631 = vmatpush1.msra.mxu0 %v1479
    %1632 = vmatprep.subr.mxu0 0.0
    %1633 = vmatpush2.msra.mxu0 0.0
    %1634 = vmatprep.subr.mxu0 0.0
    %1635 = vmatpush2.msra.mxu0 0.0
    %1636 = vmatprep.subr.mxu0 0.0
    %1637 = vmatpush2.msra.mxu0 0.0
    %1638 = vmatprep.subr.mxu0 0.0
    %1639 = vmatpush2.msra.mxu0 0.0
    %1640 = vmatprep.subr.mxu0 0.0
    %1641 = vmatpush2.msra.mxu0 0.0
    %1642 = vmatprep.subr.mxu0 0.0
    %1643 = vmatpush2.msra.mxu0 0.0
    %1644 = vmatprep.subr.mxu0 0.0
    %1645 = vmatpush2.msra.mxu0 0.0
    %1646 = vmatprep.subr.mxu0 0.0
    %1647 = vmatpush2.msra.mxu0 0.0
    %1648 = vmatprep.subr.mxu0 0.0
    %1649 = vmatpush2.msra.mxu0 0.0
    %1650 = vmatprep.subr.mxu0 0.0
    %1651 = vmatpush2.msra.mxu0 0.0
    %1652 = vmatprep.subr.mxu0 0.0
    %1653 = vmatpush2.msra.mxu0 0.0
    %1654 = vmatprep.subr.mxu0 0.0
    %1655 = vmatpush2.msra.mxu0 0.0
    %1656 = vmatprep.subr.mxu0 0.0
    %1657 = vmatpush2.msra.mxu0 0.0
    %1658 = vmatprep.subr.mxu0 0.0
    %1659 = vmatpush2.msra.mxu0 0.0
    %1660 = vmatprep.subr.mxu0 0.0
    %1661 = vmatpush2.msra.mxu0 0.0
    %1662 = vmatprep.subr.mxu0 0.0
    %1663 = vmatpush2.msra.mxu0 0.0
    %1664 = vmatprep.mubr.f32.mxu0 0.0
    %1665 = vmatmul.mubr.f32.gmra.mxu0 %v1589
    %v1666 = vpop.f32.mrf.mxu0
    %v1667 = vadd.f32 %v1570, %v1666
    %v1668 = vpop.f32.mrf.mxu0
    %1669 = vmatprep.mubr.f32.mxu0 0.0
    %1670 = vmatmul.mubr.f32.gmra.mxu0 %v1592
    %v1671 = vpop.f32.mrf.mxu0
    %v1672 = vadd.f32 %v1575, %v1671
    %v1673 = vpop.f32.mrf.mxu0
    %1674 = vmatprep.mubr.f32.mxu0 0.0
    %1675 = vmatmul.mubr.f32.gmra.mxu0 %v1595
    %v1676 = vpop.f32.mrf.mxu0
    %v1677 = vadd.f32 %v1580, %v1676
    %v1678 = vpop.f32.mrf.mxu0
    %1679 = vmatprep.mubr.f32.mxu0 0.0
    %1680 = vmatmul.mubr.f32.gmra.mxu0 %v1598
    %v1681 = vpop.f32.mrf.mxu0
    %v1682 = vadd.f32 %v1585, %v1681
    %v1683 = vpop.f32.mrf.mxu0
    %1684 = vdwg.mxu0
    %1685 = vset.pattern.permute.xlu0 3
    %1686 = vperm.xlu0 %1685, %v1014
    %v1687 = vpop.permute.xlu0 %1686
    %1689 = vset.pattern.permute.xlu0 3
    %1690 = vperm.xlu0 %1689, %v1015
    %v1691 = vpop.permute.xlu0 %1690
    %1693 = vset.pattern.permute.xlu0 3
    %1694 = vperm.xlu0 %1693, %v1016
    %v1695 = vpop.permute.xlu0 %1694
    %1697 = vset.pattern.permute.xlu0 3
    %1698 = vperm.xlu0 %1697, %v1017
    %v1699 = vpop.permute.xlu0 %1698
    %v1701 = vadd.f32 %v1667, %v1687
    %v1702 = vadd.f32 %v1672, %v1691
    %v1703 = vadd.f32 %v1677, %v1695
    %v1704 = vadd.f32 %v1682, %v1699
    %v1705 = vadd.f32 %v988, %v1701
    %v1706 = vadd.f32 %v989, %v1702
    %v1707 = vadd.f32 %v990, %v1703
    %v1708 = vadd.f32 %v991, %v1704
    %v1709 = vadd.f32 %v1705, %v1706
    %v1710 = vadd.f32 %v1709, %v1707
    %v1711 = vadd.f32 %v1710, %v1708
    %v1712 = vrot.slane %v1711, 4
    %v1713 = vadd.f32 %v1711, %v1712
    %v1714 = vrot.slane %v1713, 2
    %v1715 = vadd.f32 %v1713, %v1714
    %v1716 = vrot.slane %v1715, 1
    %v1717 = vadd.f32 %v1715, %v1716
    %v1718 = vmul.f32 %v1717, %v926
    %v1719 = vsub.f32 %v1705, %v1718
    %v1720 = vsub.f32 %v1706, %v1718
    %v1721 = vsub.f32 %v1707, %v1718
    %v1722 = vsub.f32 %v1708, %v1718
    %v1723 = vmul.f32 %v1719, %v1719
    %v1724 = vmul.f32 %v1720, %v1720
    %v1725 = vmul.f32 %v1721, %v1721
    %v1726 = vmul.f32 %v1722, %v1722
    %v1727 = vadd.f32 %v1723, %v1724
    %v1728 = vadd.f32 %v1727, %v1725
    %v1729 = vadd.f32 %v1728, %v1726
    %v1730 = vrot.slane %v1729, 4
    %v1731 = vadd.f32 %v1729, %v1730
    %v1732 = vrot.slane %v1731, 2
    %v1733 = vadd.f32 %v1731, %v1732
    %v1734 = vrot.slane %v1733, 1
    %v1735 = vadd.f32 %v1733, %v1734
    %v1736 = vmul.f32 %v1735, %v926
    %v1737 = vadd.f32 %v1736, 1e-05
    %v1738 = vrsqrt.pop %v1737
    %v1739 = vmul.f32 %v1719, %v1738
    %v1740 = vmul.f32 %v1720, %v1738
    %v1741 = vmul.f32 %v1721, %v1738
    %v1742 = vmul.f32 %v1722, %v1738
    %1743 = vset.pattern.permute.xlu0 4
    %1744 = vperm.xlu0 %1743, %v1014
    %v1745 = vpop.permute.xlu0 %1744
    %1747 = vset.pattern.permute.xlu0 4
    %1748 = vperm.xlu0 %1747, %v1015
    %v1749 = vpop.permute.xlu0 %1748
    %1751 = vset.pattern.permute.xlu0 4
    %1752 = vperm.xlu0 %1751, %v1016
    %v1753 = vpop.permute.xlu0 %1752
    %1755 = vset.pattern.permute.xlu0 4
    %1756 = vperm.xlu0 %1755, %v1017
    %v1757 = vpop.permute.xlu0 %1756
    %v1759 = vmul.f32 %v1739, %v1745
    %v1760 = vmul.f32 %v1740, %v1749
    %v1761 = vmul.f32 %v1741, %v1753
    %v1762 = vmul.f32 %v1742, %v1757
    %1763 = vset.pattern.permute.xlu0 5
    %1764 = vperm.xlu0 %1763, %v1014
    %v1765 = vpop.permute.xlu0 %1764
    %1767 = vset.pattern.permute.xlu0 5
    %1768 = vperm.xlu0 %1767, %v1015
    %v1769 = vpop.permute.xlu0 %1768
    %1771 = vset.pattern.permute.xlu0 5
    %1772 = vperm.xlu0 %1771, %v1016
    %v1773 = vpop.permute.xlu0 %1772
    %1775 = vset.pattern.permute.xlu0 5
    %1776 = vperm.xlu0 %1775, %v1017
    %v1777 = vpop.permute.xlu0 %1776
    %v1779 = vadd.f32 %v1759, %v1765
    %v1780 = vadd.f32 %v1760, %v1769
    %v1781 = vadd.f32 %v1761, %v1773
    %v1782 = vadd.f32 %v1762, %v1777
    %v1783 = vld [vmem:[%s5] sm:$0xf]
    %v1784 = vld [vmem:[%s6] sm:$0xf]
    %1786 = vset.pattern.permute.xlu0 0
    %1787 = vperm.xlu0 %1786, %v1784
    %v1788 = vpop.permute.xlu0 %1787
    %v1791 = vsel %vm250, %v1783, 0
    %1793 = vmatprep.subr.mxu0 0.0
    %1794 = vmatpush1.msra.mxu0 0.0
    %1795 = vmatprep.subr.mxu0 0.0
    %1796 = vmatpush1.msra.mxu0 0.0
    %1797 = vmatprep.subr.mxu0 0.0
    %1798 = vmatpush1.msra.mxu0 0.0
    %1799 = vmatprep.subr.mxu0 0.0
    %1800 = vmatpush1.msra.mxu0 0.0
    %1801 = vmatprep.subr.mxu0 0.0
    %1802 = vmatpush1.msra.mxu0 0.0
    %1803 = vmatprep.subr.mxu0 0.0
    %1804 = vmatpush1.msra.mxu0 0.0
    %1805 = vmatprep.subr.mxu0 0.0
    %1806 = vmatpush1.msra.mxu0 0.0
    %1807 = vmatprep.subr.mxu0 0.0
    %1808 = vmatpush1.msra.mxu0 0.0
    %1809 = vmatprep.subr.mxu0 0.0
    %1810 = vmatpush1.msra.mxu0 0.0
    %1811 = vmatprep.subr.mxu0 0.0
    %1812 = vmatpush1.msra.mxu0 0.0
    %1813 = vmatprep.subr.mxu0 0.0
    %1814 = vmatpush1.msra.mxu0 0.0
    %1815 = vmatprep.subr.mxu0 0.0
    %1816 = vmatpush1.msra.mxu0 0.0
    %1817 = vmatprep.subr.mxu0 0.0
    %1818 = vmatpush1.msra.mxu0 %v1782
    %1819 = vmatprep.subr.mxu0 0.0
    %1820 = vmatpush1.msra.mxu0 %v1781
    %1821 = vmatprep.subr.mxu0 0.0
    %1822 = vmatpush1.msra.mxu0 %v1780
    %1823 = vmatprep.subr.mxu0 0.0
    %1824 = vmatpush1.msra.mxu0 %v1779
    %1825 = vmatprep.subr.mxu0 0.0
    %1826 = vmatpush2.msra.mxu0 0.0
    %1827 = vmatprep.subr.mxu0 0.0
    %1828 = vmatpush2.msra.mxu0 0.0
    %1829 = vmatprep.subr.mxu0 0.0
    %1830 = vmatpush2.msra.mxu0 0.0
    %1831 = vmatprep.subr.mxu0 0.0
    %1832 = vmatpush2.msra.mxu0 0.0
    %1833 = vmatprep.subr.mxu0 0.0
    %1834 = vmatpush2.msra.mxu0 0.0
    %1835 = vmatprep.subr.mxu0 0.0
    %1836 = vmatpush2.msra.mxu0 0.0
    %1837 = vmatprep.subr.mxu0 0.0
    %1838 = vmatpush2.msra.mxu0 0.0
    %1839 = vmatprep.subr.mxu0 0.0
    %1840 = vmatpush2.msra.mxu0 0.0
    %1841 = vmatprep.subr.mxu0 0.0
    %1842 = vmatpush2.msra.mxu0 0.0
    %1843 = vmatprep.subr.mxu0 0.0
    %1844 = vmatpush2.msra.mxu0 0.0
    %1845 = vmatprep.subr.mxu0 0.0
    %1846 = vmatpush2.msra.mxu0 0.0
    %1847 = vmatprep.subr.mxu0 0.0
    %1848 = vmatpush2.msra.mxu0 0.0
    %1849 = vmatprep.subr.mxu0 0.0
    %1850 = vmatpush2.msra.mxu0 0.0
    %1851 = vmatprep.subr.mxu0 0.0
    %1852 = vmatpush2.msra.mxu0 0.0
    %1853 = vmatprep.subr.mxu0 0.0
    %1854 = vmatpush2.msra.mxu0 0.0
    %1855 = vmatprep.subr.mxu0 0.0
    %1856 = vmatpush2.msra.mxu0 0.0
    %1857 = vmatprep.mubr.f32.mxu0 0.0
    %1858 = vmatmul.mubr.f32.gmra.mxu0 %v1791
    %v1859 = vpop.f32.mrf.mxu0
    %v1860 = vadd.f32 %v1788, %v1859
    %v1861 = vpop.f32.mrf.mxu0
    %1862 = vdwg.mxu0
    %1863 = vst [vmem:[%s7] sm:$0xf] %v1860
    // Predicated region
    $region34: #{prototype_rune_net.1} parent=1 // pred_check
      _
    $region35: #{prototype_rune_net.1} parent=1 // pred_check_branch
      %1865 = sbr.rel (0) target = $region37
    $region36: #{prototype_rune_net.1} parent=1 // pred_region
      _
    $region37: #{prototype_rune_net.1} parent=1 // pred_fallthru
      _
    // Predicated region
    $region38: #{prototype_rune_net.1} parent=1 // pred_check
      _
    $region39: #{prototype_rune_net.1} parent=1 // pred_check_branch
      %1867 = sbr.rel (0) target = $region41
    $region40: #{prototype_rune_net.1} parent=1 // pred_region
      _
    $region41: #{prototype_rune_net.1} parent=1 // pred_fallthru
      _
    %1868 = vsyncpa [#allocation3], 1

</llo_original>
